<compile_context>
chip_gen: v7x
topology: tpu7x:2x2x1
jax: 0.10.0
libtpu: 0.0.40
codegen_flags: <defaults>
</compile_context>

<pallas_src>
import jax
import jax.numpy as jnp
from jax.experimental import pallas as pl
from jax.experimental.pallas import tpu as pltpu


# ----------------------------- fused kernel ------------------------------- #
def _nimcgcn_fused_kernel(
    a_m_ref, a_d_ref, xm_ref, xd_ref,
    gx1_w, gx1_b, gx2_w, gx2_b,
    gy1_w, gy1_b, gy2_w, gy2_b,
    lx1_w, lx1_b, lx2_w, lx2_b, lx3_w, lx3_b,
    ly1_w, ly1_b, ly2_w, ly2_b, ly3_w, ly3_b,
    recon_ref, x_ref, y_ref,
):
    f32 = jnp.float32

    def mm(a, b):
        # Full-precision accumulation on the MXU; sizes are tiny so f32
        # operands are fine on all generations (bf16 cast would only matter
        # if fg/fd/m/d grow).
        return jnp.dot(a, b, preferred_element_type=f32)

    def normalized_adj(a):
        # torch_geometric gcn_norm: add self loops (weight 1.0), then
        # D^-1/2 (A + I) D^-1/2.  Built once per graph, reused by both
        # GCN layers of that tower.  Similarity graphs are symmetric, so the
        # row- and column-degree vectors coincide; computing both avoids an
        # in-kernel transpose.
        n = a.shape[0]
        rows = jax.lax.broadcasted_iota(jnp.int32, (n, n), 0)
        cols = jax.lax.broadcasted_iota(jnp.int32, (n, n), 1)
        eye = jnp.where(rows == cols, 1.0, 0.0).astype(f32)
        a_hat = a + eye
        deg_r = jnp.sum(a_hat, axis=1, keepdims=True)   # (n, 1)
        deg_c = jnp.sum(a_hat, axis=0, keepdims=True)   # (1, n)
        dinv_r = jnp.where(deg_r > 0.0, jax.lax.rsqrt(deg_r), 0.0)
        dinv_c = jnp.where(deg_c > 0.0, jax.lax.rsqrt(deg_c), 0.0)
        return dinv_r * a_hat * dinv_c

    def gcn_relu(a_norm, x, w_ref, b_ref):
        return jnp.maximum(mm(a_norm, mm(x, w_ref[...])) + b_ref[...], 0.0)

    def linear_relu(x, w_ref, b_ref):
        return jnp.maximum(mm(x, w_ref[...]) + b_ref[...], 0.0)

    a_norm_m = normalized_adj(a_m_ref[...])
    a_norm_d = normalized_adj(a_d_ref[...])

    X1 = gcn_relu(a_norm_m, xm_ref[...], gx1_w, gx1_b)
    X = gcn_relu(a_norm_m, X1, gx2_w, gx2_b)
    Y1 = gcn_relu(a_norm_d, xd_ref[...], gy1_w, gy1_b)
    Y = gcn_relu(a_norm_d, Y1, gy2_w, gy2_b)

    x = linear_relu(linear_relu(linear_relu(X, lx1_w, lx1_b),
                                lx2_w, lx2_b), lx3_w, lx3_b)
    y = linear_relu(linear_relu(linear_relu(Y, ly1_w, ly1_b),
                                ly2_w, ly2_b), ly3_w, ly3_b)

    # x @ y.T without materializing a transpose: contract the 64-dim of both.
    recon_ref[...] = jax.lax.dot_general(
        x, y, dimension_numbers=(((1,), (1,)), ((), ())),
        preferred_element_type=f32)
    x_ref[...] = x
    y_ref[...] = y


# ------------------------------ full forward ------------------------------ #
@jax.jit
def model_forward(params, adj_m, adj_d, x_m, x_d):
    m = adj_m.shape[0]
    d = adj_d.shape[0]
    p = params
    inputs = (
        adj_m, adj_d, x_m, x_d,
        p["gx1_w"], p["gx1_b"], p["gx2_w"], p["gx2_b"],
        p["gy1_w"], p["gy1_b"], p["gy2_w"], p["gy2_b"],
        p["lx1_w"], p["lx1_b"], p["lx2_w"], p["lx2_b"], p["lx3_w"], p["lx3_b"],
        p["ly1_w"], p["ly1_b"], p["ly2_w"], p["ly2_b"], p["ly3_w"], p["ly3_b"],
    )
    vmem = pl.BlockSpec(memory_space=pltpu.MemorySpace.VMEM)   # full array, VMEM-resident
    md_recon, x, y = pl.pallas_call(
        _nimcgcn_fused_kernel,
        out_shape=(
            jax.ShapeDtypeStruct((m, d), jnp.float32),
            jax.ShapeDtypeStruct((m, 64), jnp.float32),
            jax.ShapeDtypeStruct((d, 64), jnp.float32),
        ),
        in_specs=[vmem] * len(inputs),
        out_specs=(vmem, vmem, vmem),
    )(*inputs)
    return md_recon, x, y


# --------------------------------- setup ----------------------------------- #
def init_params(key, fg, fd):
    ks = jax.random.split(key, 10)
    g = lambda k, i, o: jax.random.normal(k, (i, o), jnp.float32) * (i ** -0.5)
    z = lambda o: jnp.zeros((1, o), jnp.float32)   # biases stored 2-D once (hoisted)
    return {
        "gx1_w": g(ks[0], fg, fg), "gx1_b": z(fg),
        "gx2_w": g(ks[1], fg, fg), "gx2_b": z(fg),
        "gy1_w": g(ks[2], fd, fd), "gy1_b": z(fd),
        "gy2_w": g(ks[3], fd, fd), "gy2_b": z(fd),
        # nn.Linear stored directly as (in, out) so forward is x @ W + b
        "lx1_w": g(ks[4], fg, 256), "lx1_b": z(256),
        "lx2_w": g(ks[5], 256, 128), "lx2_b": z(128),
        "lx3_w": g(ks[6], 128, 64), "lx3_b": z(64),
        "ly1_w": g(ks[7], fd, 256), "ly1_b": z(256),
        "ly2_w": g(ks[8], 256, 128), "ly2_b": z(128),
        "ly3_w": g(ks[9], 128, 64), "ly3_b": z(64),
    }


def make_graph(key, n):
    """Dense symmetric similarity matrix -> dense adjacency (zero diagonal).

    Equivalent to the module's sparse input: enumerating every off-diagonal
    (src, tgt) pair with edge_weight = data[src, tgt] and scattering into
    A[tgt, src] reproduces exactly `sim` with its diagonal zeroed, so the
    dense matrix is built directly (no scatter, no edge enumeration).
    """
    a = jax.random.uniform(key, (n, n), jnp.float32)
    sim = 0.5 * (a + a.T)
    return sim * (1.0 - jnp.eye(n, dtype=jnp.float32))


if __name__ == "__main__":
    # small sizes consistent with the module: m microbes, d diseases, fg/fd feat dims
    m, d, fg, fd = 16, 12, 32, 32

    key = jax.random.PRNGKey(0)
    k_par, k_gm, k_gd, k_xm, k_xd = jax.random.split(key, 5)

    params = init_params(k_par, fg, fd)
    adj_m = make_graph(k_gm, m)                           # input[1]: microbe graph
    adj_d = make_graph(k_gd, d)                           # input[0]: disease graph
    x_m = jax.random.normal(k_xm, (m, fg), jnp.float32)   # stands in for t.randn(m, fg)
    x_d = jax.random.normal(k_xd, (d, fd), jnp.float32)   # stands in for t.randn(d, fd)

    md_recon, protein_repr, drug_repr = model_forward(params, adj_m, adj_d, x_m, x_d)
    md_recon = jax.block_until_ready(md_recon)

    assert md_recon.shape == (m, d)
    assert protein_repr.shape == (m, 64) and drug_repr.shape == (d, 64)
    assert bool(jnp.all(jnp.isfinite(md_recon)))
    print("KERNEL_OK")
</pallas_src>

<mosaic_0001>
module attributes {stable_mosaic.version = 11 : i64} {
  func.func @_nimcgcn_fused_kernel(%arg0: memref<16x16xf32, #tpu.memory_space<vmem>>, %arg1: memref<12x12xf32, #tpu.memory_space<vmem>>, %arg2: memref<16x32xf32, #tpu.memory_space<vmem>>, %arg3: memref<12x32xf32, #tpu.memory_space<vmem>>, %arg4: memref<32x32xf32, #tpu.memory_space<vmem>>, %arg5: memref<1x32xf32, #tpu.memory_space<vmem>>, %arg6: memref<32x32xf32, #tpu.memory_space<vmem>>, %arg7: memref<1x32xf32, #tpu.memory_space<vmem>>, %arg8: memref<32x32xf32, #tpu.memory_space<vmem>>, %arg9: memref<1x32xf32, #tpu.memory_space<vmem>>, %arg10: memref<32x32xf32, #tpu.memory_space<vmem>>, %arg11: memref<1x32xf32, #tpu.memory_space<vmem>>, %arg12: memref<32x256xf32, #tpu.memory_space<vmem>>, %arg13: memref<1x256xf32, #tpu.memory_space<vmem>>, %arg14: memref<256x128xf32, #tpu.memory_space<vmem>>, %arg15: memref<1x128xf32, #tpu.memory_space<vmem>>, %arg16: memref<128x64xf32, #tpu.memory_space<vmem>>, %arg17: memref<1x64xf32, #tpu.memory_space<vmem>>, %arg18: memref<32x256xf32, #tpu.memory_space<vmem>>, %arg19: memref<1x256xf32, #tpu.memory_space<vmem>>, %arg20: memref<256x128xf32, #tpu.memory_space<vmem>>, %arg21: memref<1x128xf32, #tpu.memory_space<vmem>>, %arg22: memref<128x64xf32, #tpu.memory_space<vmem>>, %arg23: memref<1x64xf32, #tpu.memory_space<vmem>>, %arg24: memref<16x12xf32, #tpu.memory_space<vmem>>, %arg25: memref<16x64xf32, #tpu.memory_space<vmem>>, %arg26: memref<12x64xf32, #tpu.memory_space<vmem>>) attributes {dimension_semantics = [], scalar_prefetch = 0 : i64, scratch_operands = 0 : i64, tpu.core_type = #tpu.core_type<tc>} {
    %c0 = arith.constant 0 : index
    %c0_0 = arith.constant 0 : index
    %0 = vector.load %arg0[%c0, %c0_0] : memref<16x16xf32, #tpu.memory_space<vmem>>, vector<16x16xf32>
    %1 = tpu.iota {dimensions = array<i32: 0>} : vector<16x16xi32>
    %2 = tpu.iota {dimensions = array<i32: 1>} : vector<16x16xi32>
    %3 = arith.cmpi eq, %1, %2 : vector<16x16xi32>
    %cst = arith.constant 1.000000e+00 : f32
    %cst_1 = arith.constant 0.000000e+00 : f32
    %4 = vector.broadcast %cst : f32 to vector<16x16xf32>
    %5 = vector.broadcast %cst_1 : f32 to vector<16x16xf32>
    %6 = arith.select %3, %4, %5 : vector<16x16xi1>, vector<16x16xf32>
    %7 = arith.addf %0, %6 : vector<16x16xf32>
    %cst_2 = arith.constant dense<0.000000e+00> : vector<16xf32>
    %8 = vector.multi_reduction <add>, %7, %cst_2 [1] : vector<16x16xf32> to vector<16xf32>
    %9 = vector.shape_cast %8 : vector<16xf32> to vector<16x1xf32>
    %cst_3 = arith.constant dense<0.000000e+00> : vector<16xf32>
    %10 = vector.multi_reduction <add>, %7, %cst_3 [0] : vector<16x16xf32> to vector<16xf32>
    %11 = vector.shape_cast %10 : vector<16xf32> to vector<1x16xf32>
    %cst_4 = arith.constant 0.000000e+00 : f32
    %12 = vector.broadcast %cst_4 : f32 to vector<16x1xf32>
    %13 = arith.cmpf ogt, %9, %12 : vector<16x1xf32>
    %14 = math.rsqrt %9 : vector<16x1xf32>
    %cst_5 = arith.constant 0.000000e+00 : f32
    %15 = vector.broadcast %cst_5 : f32 to vector<16x1xf32>
    %16 = arith.select %13, %14, %15 : vector<16x1xi1>, vector<16x1xf32>
    %cst_6 = arith.constant 0.000000e+00 : f32
    %17 = vector.broadcast %cst_6 : f32 to vector<1x16xf32>
    %18 = arith.cmpf ogt, %11, %17 : vector<1x16xf32>
    %19 = math.rsqrt %11 : vector<1x16xf32>
    %cst_7 = arith.constant 0.000000e+00 : f32
    %20 = vector.broadcast %cst_7 : f32 to vector<1x16xf32>
    %21 = arith.select %18, %19, %20 : vector<1x16xi1>, vector<1x16xf32>
    %22 = vector.broadcast %16 : vector<16x1xf32> to vector<16x16xf32>
    %23 = arith.mulf %22, %7 : vector<16x16xf32>
    %24 = vector.broadcast %21 : vector<1x16xf32> to vector<16x16xf32>
    %25 = arith.mulf %23, %24 : vector<16x16xf32>
    %c0_8 = arith.constant 0 : index
    %c0_9 = arith.constant 0 : index
    %26 = vector.load %arg1[%c0_8, %c0_9] : memref<12x12xf32, #tpu.memory_space<vmem>>, vector<12x12xf32>
    %27 = tpu.iota {dimensions = array<i32: 0>} : vector<12x12xi32>
    %28 = tpu.iota {dimensions = array<i32: 1>} : vector<12x12xi32>
    %29 = arith.cmpi eq, %27, %28 : vector<12x12xi32>
    %cst_10 = arith.constant 1.000000e+00 : f32
    %cst_11 = arith.constant 0.000000e+00 : f32
    %30 = vector.broadcast %cst_10 : f32 to vector<12x12xf32>
    %31 = vector.broadcast %cst_11 : f32 to vector<12x12xf32>
    %32 = arith.select %29, %30, %31 : vector<12x12xi1>, vector<12x12xf32>
    %33 = arith.addf %26, %32 : vector<12x12xf32>
    %cst_12 = arith.constant dense<0.000000e+00> : vector<12xf32>
    %34 = vector.multi_reduction <add>, %33, %cst_12 [1] : vector<12x12xf32> to vector<12xf32>
    %35 = vector.shape_cast %34 : vector<12xf32> to vector<12x1xf32>
    %cst_13 = arith.constant dense<0.000000e+00> : vector<12xf32>
    %36 = vector.multi_reduction <add>, %33, %cst_13 [0] : vector<12x12xf32> to vector<12xf32>
    %37 = vector.shape_cast %36 : vector<12xf32> to vector<1x12xf32>
    %cst_14 = arith.constant 0.000000e+00 : f32
    %38 = vector.broadcast %cst_14 : f32 to vector<12x1xf32>
    %39 = arith.cmpf ogt, %35, %38 : vector<12x1xf32>
    %40 = math.rsqrt %35 : vector<12x1xf32>
    %cst_15 = arith.constant 0.000000e+00 : f32
    %41 = vector.broadcast %cst_15 : f32 to vector<12x1xf32>
    %42 = arith.select %39, %40, %41 : vector<12x1xi1>, vector<12x1xf32>
    %cst_16 = arith.constant 0.000000e+00 : f32
    %43 = vector.broadcast %cst_16 : f32 to vector<1x12xf32>
    %44 = arith.cmpf ogt, %37, %43 : vector<1x12xf32>
    %45 = math.rsqrt %37 : vector<1x12xf32>
    %cst_17 = arith.constant 0.000000e+00 : f32
    %46 = vector.broadcast %cst_17 : f32 to vector<1x12xf32>
    %47 = arith.select %44, %45, %46 : vector<1x12xi1>, vector<1x12xf32>
    %48 = vector.broadcast %42 : vector<12x1xf32> to vector<12x12xf32>
    %49 = arith.mulf %48, %33 : vector<12x12xf32>
    %50 = vector.broadcast %47 : vector<1x12xf32> to vector<12x12xf32>
    %51 = arith.mulf %49, %50 : vector<12x12xf32>
    %c0_18 = arith.constant 0 : index
    %c0_19 = arith.constant 0 : index
    %52 = vector.load %arg2[%c0_18, %c0_19] : memref<16x32xf32, #tpu.memory_space<vmem>>, vector<16x32xf32>
    %c0_20 = arith.constant 0 : index
    %c0_21 = arith.constant 0 : index
    %53 = vector.load %arg4[%c0_20, %c0_21] : memref<32x32xf32, #tpu.memory_space<vmem>>, vector<32x32xf32>
    %cst_22 = arith.constant dense<0.000000e+00> : vector<16x32xf32>
    %54 = tpu.matmul %52, %53, %cst_22 {dimension_numbers = #tpu.dot_dimension_numbers<[1], [0], [0], [1], [0, 0, 1, 1], [], []>} : vector<16x32xf32>, vector<32x32xf32>, vector<16x32xf32> -> vector<16x32xf32>
    %cst_23 = arith.constant dense<0.000000e+00> : vector<16x32xf32>
    %55 = tpu.matmul %25, %54, %cst_23 {dimension_numbers = #tpu.dot_dimension_numbers<[1], [0], [0], [1], [0, 0, 1, 1], [], []>} : vector<16x16xf32>, vector<16x32xf32>, vector<16x32xf32> -> vector<16x32xf32>
    %c0_24 = arith.constant 0 : index
    %c0_25 = arith.constant 0 : index
    %56 = vector.load %arg5[%c0_24, %c0_25] : memref<1x32xf32, #tpu.memory_space<vmem>>, vector<1x32xf32>
    %57 = vector.broadcast %56 : vector<1x32xf32> to vector<16x32xf32>
    %58 = arith.addf %55, %57 : vector<16x32xf32>
    %cst_26 = arith.constant 0.000000e+00 : f32
    %59 = vector.broadcast %cst_26 : f32 to vector<16x32xf32>
    %60 = arith.maximumf %58, %59 : vector<16x32xf32>
    %c0_27 = arith.constant 0 : index
    %c0_28 = arith.constant 0 : index
    %61 = vector.load %arg6[%c0_27, %c0_28] : memref<32x32xf32, #tpu.memory_space<vmem>>, vector<32x32xf32>
    %cst_29 = arith.constant dense<0.000000e+00> : vector<16x32xf32>
    %62 = tpu.matmul %60, %61, %cst_29 {dimension_numbers = #tpu.dot_dimension_numbers<[1], [0], [0], [1], [0, 0, 1, 1], [], []>} : vector<16x32xf32>, vector<32x32xf32>, vector<16x32xf32> -> vector<16x32xf32>
    %cst_30 = arith.constant dense<0.000000e+00> : vector<16x32xf32>
    %63 = tpu.matmul %25, %62, %cst_30 {dimension_numbers = #tpu.dot_dimension_numbers<[1], [0], [0], [1], [0, 0, 1, 1], [], []>} : vector<16x16xf32>, vector<16x32xf32>, vector<16x32xf32> -> vector<16x32xf32>
    %c0_31 = arith.constant 0 : index
    %c0_32 = arith.constant 0 : index
    %64 = vector.load %arg7[%c0_31, %c0_32] : memref<1x32xf32, #tpu.memory_space<vmem>>, vector<1x32xf32>
    %65 = vector.broadcast %64 : vector<1x32xf32> to vector<16x32xf32>
    %66 = arith.addf %63, %65 : vector<16x32xf32>
    %cst_33 = arith.constant 0.000000e+00 : f32
    %67 = vector.broadcast %cst_33 : f32 to vector<16x32xf32>
    %68 = arith.maximumf %66, %67 : vector<16x32xf32>
    %c0_34 = arith.constant 0 : index
    %c0_35 = arith.constant 0 : index
    %69 = vector.load %arg3[%c0_34, %c0_35] : memref<12x32xf32, #tpu.memory_space<vmem>>, vector<12x32xf32>
    %c0_36 = arith.constant 0 : index
    %c0_37 = arith.constant 0 : index
    %70 = vector.load %arg8[%c0_36, %c0_37] : memref<32x32xf32, #tpu.memory_space<vmem>>, vector<32x32xf32>
    %cst_38 = arith.constant dense<0.000000e+00> : vector<12x32xf32>
    %71 = tpu.matmul %69, %70, %cst_38 {dimension_numbers = #tpu.dot_dimension_numbers<[1], [0], [0], [1], [0, 0, 1, 1], [], []>} : vector<12x32xf32>, vector<32x32xf32>, vector<12x32xf32> -> vector<12x32xf32>
    %cst_39 = arith.constant dense<0.000000e+00> : vector<12x32xf32>
    %72 = tpu.matmul %51, %71, %cst_39 {dimension_numbers = #tpu.dot_dimension_numbers<[1], [0], [0], [1], [0, 0, 1, 1], [], []>} : vector<12x12xf32>, vector<12x32xf32>, vector<12x32xf32> -> vector<12x32xf32>
    %c0_40 = arith.constant 0 : index
    %c0_41 = arith.constant 0 : index
    %73 = vector.load %arg9[%c0_40, %c0_41] : memref<1x32xf32, #tpu.memory_space<vmem>>, vector<1x32xf32>
    %74 = vector.broadcast %73 : vector<1x32xf32> to vector<12x32xf32>
    %75 = arith.addf %72, %74 : vector<12x32xf32>
    %cst_42 = arith.constant 0.000000e+00 : f32
    %76 = vector.broadcast %cst_42 : f32 to vector<12x32xf32>
    %77 = arith.maximumf %75, %76 : vector<12x32xf32>
    %c0_43 = arith.constant 0 : index
    %c0_44 = arith.constant 0 : index
    %78 = vector.load %arg10[%c0_43, %c0_44] : memref<32x32xf32, #tpu.memory_space<vmem>>, vector<32x32xf32>
    %cst_45 = arith.constant dense<0.000000e+00> : vector<12x32xf32>
    %79 = tpu.matmul %77, %78, %cst_45 {dimension_numbers = #tpu.dot_dimension_numbers<[1], [0], [0], [1], [0, 0, 1, 1], [], []>} : vector<12x32xf32>, vector<32x32xf32>, vector<12x32xf32> -> vector<12x32xf32>
    %cst_46 = arith.constant dense<0.000000e+00> : vector<12x32xf32>
    %80 = tpu.matmul %51, %79, %cst_46 {dimension_numbers = #tpu.dot_dimension_numbers<[1], [0], [0], [1], [0, 0, 1, 1], [], []>} : vector<12x12xf32>, vector<12x32xf32>, vector<12x32xf32> -> vector<12x32xf32>
    %c0_47 = arith.constant 0 : index
    %c0_48 = arith.constant 0 : index
    %81 = vector.load %arg11[%c0_47, %c0_48] : memref<1x32xf32, #tpu.memory_space<vmem>>, vector<1x32xf32>
    %82 = vector.broadcast %81 : vector<1x32xf32> to vector<12x32xf32>
    %83 = arith.addf %80, %82 : vector<12x32xf32>
    %cst_49 = arith.constant 0.000000e+00 : f32
    %84 = vector.broadcast %cst_49 : f32 to vector<12x32xf32>
    %85 = arith.maximumf %83, %84 : vector<12x32xf32>
    %c0_50 = arith.constant 0 : index
    %c0_51 = arith.constant 0 : index
    %86 = vector.load %arg12[%c0_50, %c0_51] : memref<32x256xf32, #tpu.memory_space<vmem>>, vector<32x256xf32>
    %cst_52 = arith.constant dense<0.000000e+00> : vector<16x256xf32>
    %87 = tpu.matmul %68, %86, %cst_52 {dimension_numbers = #tpu.dot_dimension_numbers<[1], [0], [0], [1], [0, 0, 1, 1], [], []>} : vector<16x32xf32>, vector<32x256xf32>, vector<16x256xf32> -> vector<16x256xf32>
    %c0_53 = arith.constant 0 : index
    %c0_54 = arith.constant 0 : index
    %88 = vector.load %arg13[%c0_53, %c0_54] : memref<1x256xf32, #tpu.memory_space<vmem>>, vector<1x256xf32>
    %89 = vector.broadcast %88 : vector<1x256xf32> to vector<16x256xf32>
    %90 = arith.addf %87, %89 : vector<16x256xf32>
    %cst_55 = arith.constant 0.000000e+00 : f32
    %91 = vector.broadcast %cst_55 : f32 to vector<16x256xf32>
    %92 = arith.maximumf %90, %91 : vector<16x256xf32>
    %c0_56 = arith.constant 0 : index
    %c0_57 = arith.constant 0 : index
    %93 = vector.load %arg14[%c0_56, %c0_57] : memref<256x128xf32, #tpu.memory_space<vmem>>, vector<256x128xf32>
    %cst_58 = arith.constant dense<0.000000e+00> : vector<16x128xf32>
    %94 = tpu.matmul %92, %93, %cst_58 {dimension_numbers = #tpu.dot_dimension_numbers<[1], [0], [0], [1], [0, 0, 1, 1], [], []>} : vector<16x256xf32>, vector<256x128xf32>, vector<16x128xf32> -> vector<16x128xf32>
    %c0_59 = arith.constant 0 : index
    %c0_60 = arith.constant 0 : index
    %95 = vector.load %arg15[%c0_59, %c0_60] : memref<1x128xf32, #tpu.memory_space<vmem>>, vector<1x128xf32>
    %96 = vector.broadcast %95 : vector<1x128xf32> to vector<16x128xf32>
    %97 = arith.addf %94, %96 : vector<16x128xf32>
    %cst_61 = arith.constant 0.000000e+00 : f32
    %98 = vector.broadcast %cst_61 : f32 to vector<16x128xf32>
    %99 = arith.maximumf %97, %98 : vector<16x128xf32>
    %c0_62 = arith.constant 0 : index
    %c0_63 = arith.constant 0 : index
    %100 = vector.load %arg16[%c0_62, %c0_63] : memref<128x64xf32, #tpu.memory_space<vmem>>, vector<128x64xf32>
    %cst_64 = arith.constant dense<0.000000e+00> : vector<16x64xf32>
    %101 = tpu.matmul %99, %100, %cst_64 {dimension_numbers = #tpu.dot_dimension_numbers<[1], [0], [0], [1], [0, 0, 1, 1], [], []>} : vector<16x128xf32>, vector<128x64xf32>, vector<16x64xf32> -> vector<16x64xf32>
    %c0_65 = arith.constant 0 : index
    %c0_66 = arith.constant 0 : index
    %102 = vector.load %arg17[%c0_65, %c0_66] : memref<1x64xf32, #tpu.memory_space<vmem>>, vector<1x64xf32>
    %103 = vector.broadcast %102 : vector<1x64xf32> to vector<16x64xf32>
    %104 = arith.addf %101, %103 : vector<16x64xf32>
    %cst_67 = arith.constant 0.000000e+00 : f32
    %105 = vector.broadcast %cst_67 : f32 to vector<16x64xf32>
    %106 = arith.maximumf %104, %105 : vector<16x64xf32>
    %c0_68 = arith.constant 0 : index
    %c0_69 = arith.constant 0 : index
    %107 = vector.load %arg18[%c0_68, %c0_69] : memref<32x256xf32, #tpu.memory_space<vmem>>, vector<32x256xf32>
    %cst_70 = arith.constant dense<0.000000e+00> : vector<12x256xf32>
    %108 = tpu.matmul %85, %107, %cst_70 {dimension_numbers = #tpu.dot_dimension_numbers<[1], [0], [0], [1], [0, 0, 1, 1], [], []>} : vector<12x32xf32>, vector<32x256xf32>, vector<12x256xf32> -> vector<12x256xf32>
    %c0_71 = arith.constant 0 : index
    %c0_72 = arith.constant 0 : index
    %109 = vector.load %arg19[%c0_71, %c0_72] : memref<1x256xf32, #tpu.memory_space<vmem>>, vector<1x256xf32>
    %110 = vector.broadcast %109 : vector<1x256xf32> to vector<12x256xf32>
    %111 = arith.addf %108, %110 : vector<12x256xf32>
    %cst_73 = arith.constant 0.000000e+00 : f32
    %112 = vector.broadcast %cst_73 : f32 to vector<12x256xf32>
    %113 = arith.maximumf %111, %112 : vector<12x256xf32>
    %c0_74 = arith.constant 0 : index
    %c0_75 = arith.constant 0 : index
    %114 = vector.load %arg20[%c0_74, %c0_75] : memref<256x128xf32, #tpu.memory_space<vmem>>, vector<256x128xf32>
    %cst_76 = arith.constant dense<0.000000e+00> : vector<12x128xf32>
    %115 = tpu.matmul %113, %114, %cst_76 {dimension_numbers = #tpu.dot_dimension_numbers<[1], [0], [0], [1], [0, 0, 1, 1], [], []>} : vector<12x256xf32>, vector<256x128xf32>, vector<12x128xf32> -> vector<12x128xf32>
    %c0_77 = arith.constant 0 : index
    %c0_78 = arith.constant 0 : index
    %116 = vector.load %arg21[%c0_77, %c0_78] : memref<1x128xf32, #tpu.memory_space<vmem>>, vector<1x128xf32>
    %117 = vector.broadcast %116 : vector<1x128xf32> to vector<12x128xf32>
    %118 = arith.addf %115, %117 : vector<12x128xf32>
    %cst_79 = arith.constant 0.000000e+00 : f32
    %119 = vector.broadcast %cst_79 : f32 to vector<12x128xf32>
    %120 = arith.maximumf %118, %119 : vector<12x128xf32>
    %c0_80 = arith.constant 0 : index
    %c0_81 = arith.constant 0 : index
    %121 = vector.load %arg22[%c0_80, %c0_81] : memref<128x64xf32, #tpu.memory_space<vmem>>, vector<128x64xf32>
    %cst_82 = arith.constant dense<0.000000e+00> : vector<12x64xf32>
    %122 = tpu.matmul %120, %121, %cst_82 {dimension_numbers = #tpu.dot_dimension_numbers<[1], [0], [0], [1], [0, 0, 1, 1], [], []>} : vector<12x128xf32>, vector<128x64xf32>, vector<12x64xf32> -> vector<12x64xf32>
    %c0_83 = arith.constant 0 : index
    %c0_84 = arith.constant 0 : index
    %123 = vector.load %arg23[%c0_83, %c0_84] : memref<1x64xf32, #tpu.memory_space<vmem>>, vector<1x64xf32>
    %124 = vector.broadcast %123 : vector<1x64xf32> to vector<12x64xf32>
    %125 = arith.addf %122, %124 : vector<12x64xf32>
    %cst_85 = arith.constant 0.000000e+00 : f32
    %126 = vector.broadcast %cst_85 : f32 to vector<12x64xf32>
    %127 = arith.maximumf %125, %126 : vector<12x64xf32>
    %cst_86 = arith.constant dense<0.000000e+00> : vector<16x12xf32>
    %128 = tpu.matmul %106, %127, %cst_86 {dimension_numbers = #tpu.dot_dimension_numbers<[1], [1], [0], [0], [0, 0, 1, 0], [], []>} : vector<16x64xf32>, vector<12x64xf32>, vector<16x12xf32> -> vector<16x12xf32>
    %c0_87 = arith.constant 0 : index
    %c0_88 = arith.constant 0 : index
    %129 = vector.load %arg24[%c0_87, %c0_88] : memref<16x12xf32, #tpu.memory_space<vmem>>, vector<16x12xf32>
    tpu.vector_store %arg24[%c0_87, %c0_88], %128 {strides = array<i32>} : memref<16x12xf32, #tpu.memory_space<vmem>>, vector<16x12xf32>,
    %c0_89 = arith.constant 0 : index
    %c0_90 = arith.constant 0 : index
    %130 = vector.load %arg25[%c0_89, %c0_90] : memref<16x64xf32, #tpu.memory_space<vmem>>, vector<16x64xf32>
    tpu.vector_store %arg25[%c0_89, %c0_90], %106 {strides = array<i32>} : memref<16x64xf32, #tpu.memory_space<vmem>>, vector<16x64xf32>,
    %c0_91 = arith.constant 0 : index
    %c0_92 = arith.constant 0 : index
    %131 = vector.load %arg26[%c0_91, %c0_92] : memref<12x64xf32, #tpu.memory_space<vmem>>, vector<12x64xf32>
    tpu.vector_store %arg26[%c0_91, %c0_92], %127 {strides = array<i32>} : memref<12x64xf32, #tpu.memory_space<vmem>>, vector<12x64xf32>,
    return
  }
}

</mosaic_0001>

<llo_original>
// kernel: model_forward.1
$region0: #{model_forward.1}
  #allocation0 [shape = 'u32[]', space=smem, size = 0x4, offset = 0x4, fixed_abs, tag = 'smem constant byte address 0x4 - core index']
  #allocation1 [shape = 'u32[144,128]{1,0:T(1,128)}', space=vmem, size = 0x12000, scoped, tag = 'internal scratch']
  %s0 = inlined_call_operand.vmem [shape: f32[16,16], index: 0, kind: input, shape index: {}]
  %s1 = inlined_call_operand.vmem [shape: f32[12,12], index: 1, kind: input, shape index: {}]
  %s2 = inlined_call_operand.vmem [shape: f32[16,32], index: 2, kind: input, shape index: {}]
  %s3 = inlined_call_operand.hbm [shape: f32[12,32], index: 3, kind: input, shape index: {}]
  %s4 = inlined_call_operand.vmem [shape: f32[32,32], index: 4, kind: input, shape index: {}]
  %s5 = inlined_call_operand.vmem [shape: f32[1,32], index: 5, kind: input, shape index: {}]
  %s6 = inlined_call_operand.hbm [shape: f32[32,32], index: 6, kind: input, shape index: {}]
  %s7 = inlined_call_operand.hbm [shape: f32[1,32], index: 7, kind: input, shape index: {}]
  %s8 = inlined_call_operand.hbm [shape: f32[32,32], index: 8, kind: input, shape index: {}]
  %s9 = inlined_call_operand.hbm [shape: f32[1,32], index: 9, kind: input, shape index: {}]
  %s10 = inlined_call_operand.hbm [shape: f32[32,32], index: 10, kind: input, shape index: {}]
  %s11 = inlined_call_operand.hbm [shape: f32[1,32], index: 11, kind: input, shape index: {}]
  %s12 = inlined_call_operand.vmem [shape: f32[32,256], index: 12, kind: input, shape index: {}]
  %s13 = inlined_call_operand.vmem [shape: f32[1,256], index: 13, kind: input, shape index: {}]
  %s14 = inlined_call_operand.vmem [shape: f32[256,128], index: 14, kind: input, shape index: {}]
  %s15 = inlined_call_operand.hbm [shape: f32[1,128], index: 15, kind: input, shape index: {}]
  %s16 = inlined_call_operand.vmem [shape: f32[128,64], index: 16, kind: input, shape index: {}]
  %s17 = inlined_call_operand.hbm [shape: f32[1,64], index: 17, kind: input, shape index: {}]
  %s18 = inlined_call_operand.hbm [shape: f32[32,256], index: 18, kind: input, shape index: {}]
  %s19 = inlined_call_operand.hbm [shape: f32[1,256], index: 19, kind: input, shape index: {}]
  %s20 = inlined_call_operand.hbm [shape: f32[256,128], index: 20, kind: input, shape index: {}]
  %s21 = inlined_call_operand.hbm [shape: f32[1,128], index: 21, kind: input, shape index: {}]
  %s22 = inlined_call_operand.vmem [shape: f32[128,64], index: 22, kind: input, shape index: {}]
  %s23 = inlined_call_operand.hbm [shape: f32[1,64], index: 23, kind: input, shape index: {}]
  %s24 = inlined_call_operand.hbm [shape: f32[16,12], index: 24, kind: output, shape index: {0}]
  %s25 = inlined_call_operand.hbm [shape: f32[16,64], index: 25, kind: output, shape index: {1}]
  %s26 = inlined_call_operand.hbm [shape: f32[12,64], index: 26, kind: output, shape index: {2}]
  %27 = xla_tuple %s24, %s25, %s26
  %s28 = sld [smem:[#allocation0]]
  $region178: #{model_forward.1} parent=0
    _
  %s30 = ssub.s32 1, %s28
  %s31 = scalar_select 0, %s30, %s28
  $region1: #{model_forward.1} parent=0
    #allocation2 [shape = 'u8[8192]{0}', space=vmem, size = 0x2000, scoped, tag = 'input window, operand 3, single buffered']
    #allocation3 [shape = 's32[1]{0}', space=sflag, size = 0x4, scoped, tag = 'scoped memory for model_forward.1']
    #allocation4 [shape = 's32[1]{0}', space=sflag, size = 0x4, scoped, tag = 'scoped memory for model_forward.1']
    #allocation5 [shape = 'u8[16384]{0}', space=vmem, size = 0x4000, scoped, tag = 'input window, operand 6, single buffered']
    #allocation6 [shape = 's32[1]{0}', space=sflag, size = 0x4, scoped, tag = 'scoped memory for model_forward.1']
    #allocation7 [shape = 'u8[512]{0}', space=vmem, size = 0x400, scoped, tag = 'input window, operand 7, single buffered']
    #allocation8 [shape = 'u8[16384]{0}', space=vmem, size = 0x4000, scoped, tag = 'input window, operand 8, single buffered']
    #allocation9 [shape = 's32[1]{0}', space=sflag, size = 0x4, scoped, tag = 'scoped memory for model_forward.1']
    #allocation10 [shape = 'u8[512]{0}', space=vmem, size = 0x400, scoped, tag = 'input window, operand 9, single buffered']
    #allocation11 [shape = 'u8[16384]{0}', space=vmem, size = 0x4000, scoped, tag = 'input window, operand 10, single buffered']
    #allocation12 [shape = 's32[1]{0}', space=sflag, size = 0x4, scoped, tag = 'scoped memory for model_forward.1']
    #allocation13 [shape = 'u8[512]{0}', space=vmem, size = 0x400, scoped, tag = 'input window, operand 11, single buffered']
    #allocation14 [shape = 'u8[512]{0}', space=vmem, size = 0x400, scoped, tag = 'input window, operand 15, single buffered']
    #allocation15 [shape = 's32[1]{0}', space=sflag, size = 0x4, scoped, tag = 'scoped memory for model_forward.1']
    #allocation16 [shape = 'u8[512]{0}', space=vmem, size = 0x400, scoped, tag = 'input window, operand 17, single buffered']
    #allocation17 [shape = 'u8[32768]{0}', space=vmem, size = 0x8000, scoped, tag = 'input window, operand 18, single buffered']
    #allocation18 [shape = 's32[1]{0}', space=sflag, size = 0x4, scoped, tag = 'scoped memory for model_forward.1']
    #allocation19 [shape = 'u8[1024]{0}', space=vmem, size = 0x400, scoped, tag = 'input window, operand 19, single buffered']
    #allocation20 [shape = 'u8[131072]{0}', space=vmem, size = 0x20000, scoped, tag = 'input window, operand 20, single buffered']
    #allocation21 [shape = 's32[1]{0}', space=sflag, size = 0x4, scoped, tag = 'scoped memory for model_forward.1']
    #allocation22 [shape = 'u8[512]{0}', space=vmem, size = 0x400, scoped, tag = 'input window, operand 21, single buffered']
    #allocation23 [shape = 'u8[512]{0}', space=vmem, size = 0x400, scoped, tag = 'input window, operand 23, single buffered']
    #allocation24 [shape = 's32[1]{0}', space=sflag, size = 0x4, scoped, tag = 'scoped memory for model_forward.1']
    #allocation25 [shape = 'u8[8192]{0}', space=vmem, size = 0x2000, scoped, tag = 'output window, operand 0, single buffered']
    #allocation26 [shape = 'u8[8192]{0}', space=vmem, size = 0x2000, scoped, tag = 'output window, operand 1, single buffered']
    #allocation27 [shape = 's32[1]{0}', space=sflag, size = 0x4, scoped, tag = 'scoped memory for model_forward.1']
    #allocation28 [shape = 'u8[8192]{0}', space=vmem, size = 0x2000, scoped, tag = 'output window, operand 2, single buffered']
    %32 = vsyncpa [#allocation3], 0
    %33 = vsyncpa [#allocation6], 0
    %34 = vsyncpa [#allocation9], 0
    %35 = vsyncpa [#allocation12], 0
    %36 = vsyncpa [#allocation15], 0
    %37 = vsyncpa [#allocation18], 0
    %38 = vsyncpa [#allocation21], 0
    %39 = vsyncpa [#allocation24], 0
    %40 = vsyncpa [#allocation4], 0
    %41 = vsyncpa [#allocation27], 0
    // Predicated region
    $region2: #{model_forward.1} parent=1 // pred_check
      _
    $region3: #{model_forward.1} parent=1 // pred_check_branch
      %43 = sbr.rel (0) target = $region5
    $region4: #{model_forward.1} parent=1 // pred_region
      _
    $region5: #{model_forward.1} parent=1 // pred_fallthru
      _
    // Predicated region
    $region6: #{model_forward.1} parent=1 // pred_check
      _
    $region7: #{model_forward.1} parent=1 // pred_check_branch
      %45 = sbr.rel (0) target = $region9
    $region8: #{model_forward.1} parent=1 // pred_region
      _
    $region9: #{model_forward.1} parent=1 // pred_fallthru
      _
    // Predicated region
    $region10: #{model_forward.1} parent=1 // pred_check
      _
    $region11: #{model_forward.1} parent=1 // pred_check_branch
      %47 = sbr.rel (0) target = $region13
    $region12: #{model_forward.1} parent=1 // pred_region
      _
    $region13: #{model_forward.1} parent=1 // pred_fallthru
      _
    // Predicated region
    $region14: #{model_forward.1} parent=1 // pred_check
      _
    $region15: #{model_forward.1} parent=1 // pred_check_branch
      %49 = sbr.rel (0) target = $region17
    $region16: #{model_forward.1} parent=1 // pred_region
      %s51 = ssub.s32 256, 256
      %52 = vsyncadd [#allocation3], %s51
      %s53 = sshll.u32 [#allocation2], 4
      %s54 = int_to_ptr.vmem [resolvable:$true] %s53
      %59 = dma.hbm_to_vmem [thread:$0]  %s3, 256, %s54, [#allocation3], 128, 128, 8
    $region17: #{model_forward.1} parent=1 // pred_fallthru
      _
    // Predicated region
    $region18: #{model_forward.1} parent=1 // pred_check
      _
    $region19: #{model_forward.1} parent=1 // pred_check_branch
      %61 = sbr.rel (0) target = $region21
    $region20: #{model_forward.1} parent=1 // pred_region
      _
    $region21: #{model_forward.1} parent=1 // pred_fallthru
      _
    // Predicated region
    $region22: #{model_forward.1} parent=1 // pred_check
      _
    $region23: #{model_forward.1} parent=1 // pred_check_branch
      %63 = sbr.rel (0) target = $region25
    $region24: #{model_forward.1} parent=1 // pred_region
      _
    $region25: #{model_forward.1} parent=1 // pred_fallthru
      _
    // Predicated region
    $region26: #{model_forward.1} parent=1 // pred_check
      _
    $region27: #{model_forward.1} parent=1 // pred_check_branch
      %65 = sbr.rel (0) target = $region29
    $region28: #{model_forward.1} parent=1 // pred_region
      %s67 = ssub.s32 512, 512
      %68 = vsyncadd [#allocation6], %s67
      %s69 = sshll.u32 [#allocation5], 4
      %s70 = int_to_ptr.vmem [resolvable:$true] %s69
      %75 = dma.hbm_to_vmem [thread:$0]  %s6, 512, %s70, [#allocation6], 128, 128, 8
    $region29: #{model_forward.1} parent=1 // pred_fallthru
      _
    // Predicated region
    $region30: #{model_forward.1} parent=1 // pred_check
      _
    $region31: #{model_forward.1} parent=1 // pred_check_branch
      %77 = sbr.rel (0) target = $region33
    $region32: #{model_forward.1} parent=1 // pred_region
      %s79 = ssub.s32 16, 16
      %80 = vsyncadd [#allocation6], %s79
      %s82 = sshll.u32 [#allocation7], 4
      %s83 = int_to_ptr.vmem [resolvable:$true] %s82
      %85 = dma.hbm_to_vmem [thread:$0]  %s7, 16, %s83, [#allocation6]
    $region33: #{model_forward.1} parent=1 // pred_fallthru
      _
    // Predicated region
    $region34: #{model_forward.1} parent=1 // pred_check
      _
    $region35: #{model_forward.1} parent=1 // pred_check_branch
      %87 = sbr.rel (0) target = $region37
    $region36: #{model_forward.1} parent=1 // pred_region
      %s89 = ssub.s32 512, 512
      %90 = vsyncadd [#allocation9], %s89
      %s91 = sshll.u32 [#allocation8], 4
      %s92 = int_to_ptr.vmem [resolvable:$true] %s91
      %97 = dma.hbm_to_vmem [thread:$0]  %s8, 512, %s92, [#allocation9], 128, 128, 8
    $region37: #{model_forward.1} parent=1 // pred_fallthru
      _
    // Predicated region
    $region38: #{model_forward.1} parent=1 // pred_check
      _
    $region39: #{model_forward.1} parent=1 // pred_check_branch
      %99 = sbr.rel (0) target = $region41
    $region40: #{model_forward.1} parent=1 // pred_region
      %s101 = ssub.s32 16, 16
      %102 = vsyncadd [#allocation9], %s101
      %s104 = sshll.u32 [#allocation10], 4
      %s105 = int_to_ptr.vmem [resolvable:$true] %s104
      %107 = dma.hbm_to_vmem [thread:$0]  %s9, 16, %s105, [#allocation9]
    $region41: #{model_forward.1} parent=1 // pred_fallthru
      _
    // Predicated region
    $region42: #{model_forward.1} parent=1 // pred_check
      _
    $region43: #{model_forward.1} parent=1 // pred_check_branch
      %109 = sbr.rel (0) target = $region45
    $region44: #{model_forward.1} parent=1 // pred_region
      %s111 = ssub.s32 512, 512
      %112 = vsyncadd [#allocation12], %s111
      %s113 = sshll.u32 [#allocation11], 4
      %s114 = int_to_ptr.vmem [resolvable:$true] %s113
      %119 = dma.hbm_to_vmem [thread:$0]  %s10, 512, %s114, [#allocation12], 128, 128, 8
    $region45: #{model_forward.1} parent=1 // pred_fallthru
      _
    // Predicated region
    $region46: #{model_forward.1} parent=1 // pred_check
      _
    $region47: #{model_forward.1} parent=1 // pred_check_branch
      %121 = sbr.rel (0) target = $region49
    $region48: #{model_forward.1} parent=1 // pred_region
      %s123 = ssub.s32 16, 16
      %124 = vsyncadd [#allocation12], %s123
      %s126 = sshll.u32 [#allocation13], 4
      %s127 = int_to_ptr.vmem [resolvable:$true] %s126
      %129 = dma.hbm_to_vmem [thread:$0]  %s11, 16, %s127, [#allocation12]
    $region49: #{model_forward.1} parent=1 // pred_fallthru
      _
    // Predicated region
    $region50: #{model_forward.1} parent=1 // pred_check
      _
    $region51: #{model_forward.1} parent=1 // pred_check_branch
      %131 = sbr.rel (0) target = $region53
    $region52: #{model_forward.1} parent=1 // pred_region
      _
    $region53: #{model_forward.1} parent=1 // pred_fallthru
      _
    // Predicated region
    $region54: #{model_forward.1} parent=1 // pred_check
      _
    $region55: #{model_forward.1} parent=1 // pred_check_branch
      %133 = sbr.rel (0) target = $region57
    $region56: #{model_forward.1} parent=1 // pred_region
      _
    $region57: #{model_forward.1} parent=1 // pred_fallthru
      _
    // Predicated region
    $region58: #{model_forward.1} parent=1 // pred_check
      _
    $region59: #{model_forward.1} parent=1 // pred_check_branch
      %135 = sbr.rel (0) target = $region61
    $region60: #{model_forward.1} parent=1 // pred_region
      _
    $region61: #{model_forward.1} parent=1 // pred_fallthru
      _
    // Predicated region
    $region62: #{model_forward.1} parent=1 // pred_check
      _
    $region63: #{model_forward.1} parent=1 // pred_check_branch
      %137 = sbr.rel (0) target = $region65
    $region64: #{model_forward.1} parent=1 // pred_region
      %s139 = ssub.s32 16, 16
      %140 = vsyncadd [#allocation15], %s139
      %s142 = sshll.u32 [#allocation14], 4
      %s143 = int_to_ptr.vmem [resolvable:$true] %s142
      %145 = dma.hbm_to_vmem [thread:$0]  %s15, 16, %s143, [#allocation15]
    $region65: #{model_forward.1} parent=1 // pred_fallthru
      _
    // Predicated region
    $region66: #{model_forward.1} parent=1 // pred_check
      _
    $region67: #{model_forward.1} parent=1 // pred_check_branch
      %147 = sbr.rel (0) target = $region69
    $region68: #{model_forward.1} parent=1 // pred_region
      _
    $region69: #{model_forward.1} parent=1 // pred_fallthru
      _
    // Predicated region
    $region70: #{model_forward.1} parent=1 // pred_check
      _
    $region71: #{model_forward.1} parent=1 // pred_check_branch
      %149 = sbr.rel (0) target = $region73
    $region72: #{model_forward.1} parent=1 // pred_region
      %s151 = ssub.s32 16, 16
      %152 = vsyncadd [#allocation15], %s151
      %s154 = sshll.u32 [#allocation16], 4
      %s155 = int_to_ptr.vmem [resolvable:$true] %s154
      %157 = dma.hbm_to_vmem [thread:$0]  %s17, 16, %s155, [#allocation15]
    $region73: #{model_forward.1} parent=1 // pred_fallthru
      _
    // Predicated region
    $region74: #{model_forward.1} parent=1 // pred_check
      _
    $region75: #{model_forward.1} parent=1 // pred_check_branch
      %159 = sbr.rel (0) target = $region77
    $region76: #{model_forward.1} parent=1 // pred_region
      %s161 = ssub.s32 1024, 1024
      %162 = vsyncadd [#allocation18], %s161
      %s163 = sshll.u32 [#allocation17], 4
      %s164 = int_to_ptr.vmem [resolvable:$true] %s163
      %169 = dma.hbm_to_vmem [thread:$0]  %s18, 1024, %s164, [#allocation18], 256, 256, 16
    $region77: #{model_forward.1} parent=1 // pred_fallthru
      _
    // Predicated region
    $region78: #{model_forward.1} parent=1 // pred_check
      _
    $region79: #{model_forward.1} parent=1 // pred_check_branch
      %171 = sbr.rel (0) target = $region81
    $region80: #{model_forward.1} parent=1 // pred_region
      %s173 = ssub.s32 32, 32
      %174 = vsyncadd [#allocation18], %s173
      %s176 = sshll.u32 [#allocation19], 4
      %s177 = int_to_ptr.vmem [resolvable:$true] %s176
      %179 = dma.hbm_to_vmem [thread:$0]  %s19, 32, %s177, [#allocation18]
    $region81: #{model_forward.1} parent=1 // pred_fallthru
      _
    // Predicated region
    $region82: #{model_forward.1} parent=1 // pred_check
      _
    $region83: #{model_forward.1} parent=1 // pred_check_branch
      %181 = sbr.rel (0) target = $region85
    $region84: #{model_forward.1} parent=1 // pred_region
      %s183 = ssub.s32 4096, 4096
      %184 = vsyncadd [#allocation21], %s183
      %s185 = sshll.u32 [#allocation20], 4
      %s186 = int_to_ptr.vmem [resolvable:$true] %s185
      %191 = dma.hbm_to_vmem [thread:$0]  %s20, 4096, %s186, [#allocation21], 128, 128, 8
    $region85: #{model_forward.1} parent=1 // pred_fallthru
      _
    // Predicated region
    $region86: #{model_forward.1} parent=1 // pred_check
      _
    $region87: #{model_forward.1} parent=1 // pred_check_branch
      %193 = sbr.rel (0) target = $region89
    $region88: #{model_forward.1} parent=1 // pred_region
      %s195 = ssub.s32 16, 16
      %196 = vsyncadd [#allocation21], %s195
      %s198 = sshll.u32 [#allocation22], 4
      %s199 = int_to_ptr.vmem [resolvable:$true] %s198
      %201 = dma.hbm_to_vmem [thread:$0]  %s21, 16, %s199, [#allocation21]
    $region89: #{model_forward.1} parent=1 // pred_fallthru
      _
    // Predicated region
    $region90: #{model_forward.1} parent=1 // pred_check
      _
    $region91: #{model_forward.1} parent=1 // pred_check_branch
      %203 = sbr.rel (0) target = $region93
    $region92: #{model_forward.1} parent=1 // pred_region
      _
    $region93: #{model_forward.1} parent=1 // pred_fallthru
      _
    // Predicated region
    $region94: #{model_forward.1} parent=1 // pred_check
      _
    $region95: #{model_forward.1} parent=1 // pred_check_branch
      %205 = sbr.rel (0) target = $region97
    $region96: #{model_forward.1} parent=1 // pred_region
      %s207 = ssub.s32 16, 16
      %208 = vsyncadd [#allocation24], %s207
      %s210 = sshll.u32 [#allocation23], 4
      %s211 = int_to_ptr.vmem [resolvable:$true] %s210
      %213 = dma.hbm_to_vmem [thread:$0]  %s23, 16, %s211, [#allocation24]
    $region97: #{model_forward.1} parent=1 // pred_fallthru
      _
    // Predicated region
    $region98: #{model_forward.1} parent=1 // pred_check
      _
    $region99: #{model_forward.1} parent=1 // pred_check_branch
      %215 = sbr.rel (0) target = $region101
    $region100: #{model_forward.1} parent=1 // pred_region
      %216 = dma.done [#allocation3], 256
    $region101: #{model_forward.1} parent=1 // pred_fallthru
      _
    // Predicated region
    $region102: #{model_forward.1} parent=1 // pred_check
      _
    $region103: #{model_forward.1} parent=1 // pred_check_branch
      %218 = sbr.rel (0) target = $region105
    $region104: #{model_forward.1} parent=1 // pred_region
      %219 = dma.done [#allocation6], 512
    $region105: #{model_forward.1} parent=1 // pred_fallthru
      _
    // Predicated region
    $region106: #{model_forward.1} parent=1 // pred_check
      _
    $region107: #{model_forward.1} parent=1 // pred_check_branch
      %221 = sbr.rel (0) target = $region109
    $region108: #{model_forward.1} parent=1 // pred_region
      %222 = dma.done [#allocation6], 16
    $region109: #{model_forward.1} parent=1 // pred_fallthru
      _
    // Predicated region
    $region110: #{model_forward.1} parent=1 // pred_check
      _
    $region111: #{model_forward.1} parent=1 // pred_check_branch
      %224 = sbr.rel (0) target = $region113
    $region112: #{model_forward.1} parent=1 // pred_region
      %225 = dma.done [#allocation9], 512
    $region113: #{model_forward.1} parent=1 // pred_fallthru
      _
    // Predicated region
    $region114: #{model_forward.1} parent=1 // pred_check
      _
    $region115: #{model_forward.1} parent=1 // pred_check_branch
      %227 = sbr.rel (0) target = $region117
    $region116: #{model_forward.1} parent=1 // pred_region
      %228 = dma.done [#allocation9], 16
    $region117: #{model_forward.1} parent=1 // pred_fallthru
      _
    // Predicated region
    $region118: #{model_forward.1} parent=1 // pred_check
      _
    $region119: #{model_forward.1} parent=1 // pred_check_branch
      %230 = sbr.rel (0) target = $region121
    $region120: #{model_forward.1} parent=1 // pred_region
      %231 = dma.done [#allocation12], 512
    $region121: #{model_forward.1} parent=1 // pred_fallthru
      _
    // Predicated region
    $region122: #{model_forward.1} parent=1 // pred_check
      _
    $region123: #{model_forward.1} parent=1 // pred_check_branch
      %233 = sbr.rel (0) target = $region125
    $region124: #{model_forward.1} parent=1 // pred_region
      %234 = dma.done [#allocation12], 16
    $region125: #{model_forward.1} parent=1 // pred_fallthru
      _
    // Predicated region
    $region126: #{model_forward.1} parent=1 // pred_check
      _
    $region127: #{model_forward.1} parent=1 // pred_check_branch
      %236 = sbr.rel (0) target = $region129
    $region128: #{model_forward.1} parent=1 // pred_region
      %237 = dma.done [#allocation15], 16
    $region129: #{model_forward.1} parent=1 // pred_fallthru
      _
    // Predicated region
    $region130: #{model_forward.1} parent=1 // pred_check
      _
    $region131: #{model_forward.1} parent=1 // pred_check_branch
      %239 = sbr.rel (0) target = $region133
    $region132: #{model_forward.1} parent=1 // pred_region
      %240 = dma.done [#allocation15], 16
    $region133: #{model_forward.1} parent=1 // pred_fallthru
      _
    // Predicated region
    $region134: #{model_forward.1} parent=1 // pred_check
      _
    $region135: #{model_forward.1} parent=1 // pred_check_branch
      %242 = sbr.rel (0) target = $region137
    $region136: #{model_forward.1} parent=1 // pred_region
      %243 = dma.done [#allocation18], 1024
    $region137: #{model_forward.1} parent=1 // pred_fallthru
      _
    // Predicated region
    $region138: #{model_forward.1} parent=1 // pred_check
      _
    $region139: #{model_forward.1} parent=1 // pred_check_branch
      %245 = sbr.rel (0) target = $region141
    $region140: #{model_forward.1} parent=1 // pred_region
      %246 = dma.done [#allocation18], 32
    $region141: #{model_forward.1} parent=1 // pred_fallthru
      _
    // Predicated region
    $region142: #{model_forward.1} parent=1 // pred_check
      _
    $region143: #{model_forward.1} parent=1 // pred_check_branch
      %248 = sbr.rel (0) target = $region145
    $region144: #{model_forward.1} parent=1 // pred_region
      %249 = dma.done [#allocation21], 4096
    $region145: #{model_forward.1} parent=1 // pred_fallthru
      _
    // Predicated region
    $region146: #{model_forward.1} parent=1 // pred_check
      _
    $region147: #{model_forward.1} parent=1 // pred_check_branch
      %251 = sbr.rel (0) target = $region149
    $region148: #{model_forward.1} parent=1 // pred_region
      %252 = dma.done [#allocation21], 16
    $region149: #{model_forward.1} parent=1 // pred_fallthru
      _
    // Predicated region
    $region150: #{model_forward.1} parent=1 // pred_check
      _
    $region151: #{model_forward.1} parent=1 // pred_check_branch
      %254 = sbr.rel (0) target = $region153
    $region152: #{model_forward.1} parent=1 // pred_region
      %255 = dma.done [#allocation24], 16
    $region153: #{model_forward.1} parent=1 // pred_fallthru
      _
    %v256 = vld [vmem:[%s0] sm:$0xff]
    %v257 = vld [vmem:[%s0 + $0x8] sm:$0xff]
    %v258 = vlaneseq
    %v259 = vshrl.u32 %v258, 7
    %v260 = vadd.s32 %v259, 8
    %v261 = vlaneseq
    %v262 = vand.u32 %v261, 127
    %vm263 = vcmp.eq.s32.totalorder %v259, %v262
    %vm264 = vcmp.eq.s32.totalorder %v260, %v262
    %v265 = vsel %vm263, 1.0, 0.0
    %v266 = vsel %vm264, 1.0, 0.0
    %v267 = vadd.f32 %v256, %v265
    %v268 = vadd.f32 %v257, %v266
    %vm269 = vcmask 130048
    %v270 = vsel %vm269, %v267, 0.0
    %271 = vadd.xlane.f32.xlu0 %v270
    %v272 = vpop.xlane.xlu0 %271
    %v273 = vsel %vm269, %v268, 0.0
    %274 = vadd.xlane.f32.xlu0 %v273
    %v275 = vpop.xlane.xlu0 %274
    %v276 = vadd.f32 %v270, %v273
    %v277 = vrot.slane %v276, 4
    %v278 = vadd.f32 %v276, %v277
    %v279 = vrot.slane %v278, 2
    %v280 = vadd.f32 %v278, %v279
    %v281 = vrot.slane %v280, 1
    %v282 = vadd.f32 %v280, %v281
    %vm283 = vcmp.gt.f32.partialorder %v272, 0.0
    %vm284 = vcmp.gt.f32.partialorder %v275, 0.0
    %v285 = vrsqrt.pop %v272
    %v286 = vrsqrt.pop %v275
    %v287 = vsel %vm283, %v285, 0.0
    %v288 = vsel %vm284, %v286, 0.0
    %vm289 = vcmp.gt.f32.partialorder %v282, 0.0
    %v290 = vrsqrt.pop %v282
    %v291 = vsel %vm289, %v290, 0.0
    %v292 = vmul.f32 %v287, %v267
    %v293 = vmul.f32 %v288, %v268
    %v294 = vmul.f32 %v292, %v291
    %v295 = vmul.f32 %v293, %v291
    %v296 = vld [vmem:[%s1] sm:$0xff]
    %v297 = vld [vmem:[%s1 + $0x8] sm:$0xf]
    %v298 = vadd.f32 %v296, %v265
    %v299 = vadd.f32 %v297, %v266
    %vm300 = vcmask 97280
    %v301 = vsel %vm300, %v298, 0.0
    %302 = vadd.xlane.f32.xlu0 %v301
    %v303 = vpop.xlane.xlu0 %302
    %vm304 = vcmask 93184
    %v305 = vsel %vm304, %v299, 0.0
    %306 = vadd.xlane.f32.xlu0 %v305
    %v307 = vpop.xlane.xlu0 %306
    %v308 = vadd.f32 %v301, %v305
    %v309 = vrot.slane %v308, 4
    %v310 = vadd.f32 %v308, %v309
    %v311 = vrot.slane %v310, 2
    %v312 = vadd.f32 %v310, %v311
    %v313 = vrot.slane %v312, 1
    %v314 = vadd.f32 %v312, %v313
    %vm315 = vcmp.gt.f32.partialorder %v303, 0.0
    %vm316 = vcmp.gt.f32.partialorder %v307, 0.0
    %v317 = vrsqrt.pop %v303
    %v318 = vrsqrt.pop %v307
    %v319 = vsel %vm315, %v317, 0.0
    %v320 = vsel %vm316, %v318, 0.0
    %vm321 = vcmp.gt.f32.partialorder %v314, 0.0
    %v322 = vrsqrt.pop %v314
    %v323 = vsel %vm321, %v322, 0.0
    %v324 = vmul.f32 %v319, %v298
    %v325 = vmul.f32 %v320, %v299
    %v326 = vmul.f32 %v324, %v323
    %v327 = vmul.f32 %v325, %v323
    %v328 = vld [vmem:[%s2] sm:$0xff]
    %v329 = vld [vmem:[%s2 + $0x8] sm:$0xff]
    %v330 = vld [vmem:[%s4] sm:$0xff]
    %v331 = vld [vmem:[%s4 + $0x8] sm:$0xff]
    %v332 = vld [vmem:[%s4 + $0x10] sm:$0xff]
    %v333 = vld [vmem:[%s4 + $0x18] sm:$0xff]
    %vm334 = vcmask 261120
    %v336 = vsel %vm334, %v328, 0
    %v339 = vsel %vm334, %v329, 0
    %341 = vmatprep.subr.mxu0 0.0
    %342 = vmatpush1.msra.mxu0 %v330
    %343 = vmatprep.subr.mxu0 0.0
    %344 = vmatpush1.msra.mxu0 %v331
    %345 = vmatprep.subr.mxu0 0.0
    %346 = vmatpush1.msra.mxu0 %v332
    %347 = vmatprep.subr.mxu0 0.0
    %348 = vmatpush1.msra.mxu0 %v333
    %349 = vmatprep.subr.mxu0 0.0
    %350 = vmatpush1.msra.mxu0 0.0
    %351 = vmatprep.subr.mxu0 0.0
    %352 = vmatpush1.msra.mxu0 0.0
    %353 = vmatprep.subr.mxu0 0.0
    %354 = vmatpush1.msra.mxu0 0.0
    %355 = vmatprep.subr.mxu0 0.0
    %356 = vmatpush1.msra.mxu0 0.0
    %357 = vmatprep.subr.mxu0 0.0
    %358 = vmatpush1.msra.mxu0 0.0
    %359 = vmatprep.subr.mxu0 0.0
    %360 = vmatpush1.msra.mxu0 0.0
    %361 = vmatprep.subr.mxu0 0.0
    %362 = vmatpush1.msra.mxu0 0.0
    %363 = vmatprep.subr.mxu0 0.0
    %364 = vmatpush1.msra.mxu0 0.0
    %365 = vmatprep.subr.mxu0 0.0
    %366 = vmatpush1.msra.mxu0 0.0
    %367 = vmatprep.subr.mxu0 0.0
    %368 = vmatpush1.msra.mxu0 0.0
    %369 = vmatprep.subr.mxu0 0.0
    %370 = vmatpush1.msra.mxu0 0.0
    %371 = vmatprep.subr.mxu0 0.0
    %372 = vmatpush1.msra.mxu0 0.0
    %373 = vmatprep.subr.mxu0 0.0
    %374 = vmatpush1.msra.mxu0 0.0
    %375 = vmatprep.subr.mxu0 0.0
    %376 = vmatpush1.msra.mxu0 0.0
    %377 = vmatprep.subr.mxu0 0.0
    %378 = vmatpush1.msra.mxu0 0.0
    %379 = vmatprep.subr.mxu0 0.0
    %380 = vmatpush1.msra.mxu0 0.0
    %381 = vmatprep.subr.mxu0 0.0
    %382 = vmatpush1.msra.mxu0 0.0
    %383 = vmatprep.subr.mxu0 0.0
    %384 = vmatpush1.msra.mxu0 0.0
    %385 = vmatprep.subr.mxu0 0.0
    %386 = vmatpush1.msra.mxu0 0.0
    %387 = vmatprep.subr.mxu0 0.0
    %388 = vmatpush1.msra.mxu0 0.0
    %389 = vmatprep.subr.mxu0 0.0
    %390 = vmatpush1.msra.mxu0 0.0
    %391 = vmatprep.subr.mxu0 0.0
    %392 = vmatpush1.msra.mxu0 0.0
    %393 = vmatprep.subr.mxu0 0.0
    %394 = vmatpush1.msra.mxu0 0.0
    %395 = vmatprep.subr.mxu0 0.0
    %396 = vmatpush1.msra.mxu0 0.0
    %397 = vmatprep.subr.mxu0 0.0
    %398 = vmatpush1.msra.mxu0 0.0
    %399 = vmatprep.subr.mxu0 0.0
    %400 = vmatpush1.msra.mxu0 0.0
    %401 = vmatprep.subr.mxu0 0.0
    %402 = vmatpush1.msra.mxu0 0.0
    %403 = vmatprep.subr.mxu0 0.0
    %404 = vmatpush1.msra.mxu0 0.0
    %405 = vmatprep.mubr.f32.mxu0 0.0
    %406 = vmatmul.mubr.f32.gmra.mrb[0].mxu0 %v336
    %v407 = vpop.f32.mrb[0].mxu0
    %v408 = vadd.f32 0.0, %v407
    %v409 = vpop.f32.mrb[0].mxu0
    %410 = vmatprep.mubr.f32.mxu0 0.0
    %411 = vmatmul.mubr.f32.gmra.mrb[0].mxu0 %v339
    %v412 = vpop.f32.mrb[0].mxu0
    %v413 = vadd.f32 0.0, %v412
    %v414 = vpop.f32.mrb[0].mxu0
    %415 = vdwg.mxu0
    %v416 = vld [vmem:[%s5] sm:$0x1]
    %v418 = vlaneseq
    %v419 = vshrl.u32 %v418, 7
    %v420 = vsub.s32 0, %v419
    %v421 = vrot.slane %v416, %v420
    %v424 = vsel %vm269, %v294, 0
    %v427 = vsel %vm269, %v295, 0
    %429 = vmatprep.subr.mxu0 0.0
    %430 = vmatpush1.msra.mxu0 %v408
    %431 = vmatprep.subr.mxu0 0.0
    %432 = vmatpush1.msra.mxu0 %v413
    %433 = vmatprep.subr.mxu0 0.0
    %434 = vmatpush1.msra.mxu0 0.0
    %435 = vmatprep.subr.mxu0 0.0
    %436 = vmatpush1.msra.mxu0 0.0
    %437 = vmatprep.subr.mxu0 0.0
    %438 = vmatpush1.msra.mxu0 0.0
    %439 = vmatprep.subr.mxu0 0.0
    %440 = vmatpush1.msra.mxu0 0.0
    %441 = vmatprep.subr.mxu0 0.0
    %442 = vmatpush1.msra.mxu0 0.0
    %443 = vmatprep.subr.mxu0 0.0
    %444 = vmatpush1.msra.mxu0 0.0
    %445 = vmatprep.subr.mxu0 0.0
    %446 = vmatpush1.msra.mxu0 0.0
    %447 = vmatprep.subr.mxu0 0.0
    %448 = vmatpush1.msra.mxu0 0.0
    %449 = vmatprep.subr.mxu0 0.0
    %450 = vmatpush1.msra.mxu0 0.0
    %451 = vmatprep.subr.mxu0 0.0
    %452 = vmatpush1.msra.mxu0 0.0
    %453 = vmatprep.subr.mxu0 0.0
    %454 = vmatpush1.msra.mxu0 0.0
    %455 = vmatprep.subr.mxu0 0.0
    %456 = vmatpush1.msra.mxu0 0.0
    %457 = vmatprep.subr.mxu0 0.0
    %458 = vmatpush1.msra.mxu0 0.0
    %459 = vmatprep.subr.mxu0 0.0
    %460 = vmatpush1.msra.mxu0 0.0
    %461 = vmatprep.subr.mxu0 0.0
    %462 = vmatpush1.msra.mxu0 0.0
    %463 = vmatprep.subr.mxu0 0.0
    %464 = vmatpush1.msra.mxu0 0.0
    %465 = vmatprep.subr.mxu0 0.0
    %466 = vmatpush1.msra.mxu0 0.0
    %467 = vmatprep.subr.mxu0 0.0
    %468 = vmatpush1.msra.mxu0 0.0
    %469 = vmatprep.subr.mxu0 0.0
    %470 = vmatpush1.msra.mxu0 0.0
    %471 = vmatprep.subr.mxu0 0.0
    %472 = vmatpush1.msra.mxu0 0.0
    %473 = vmatprep.subr.mxu0 0.0
    %474 = vmatpush1.msra.mxu0 0.0
    %475 = vmatprep.subr.mxu0 0.0
    %476 = vmatpush1.msra.mxu0 0.0
    %477 = vmatprep.subr.mxu0 0.0
    %478 = vmatpush1.msra.mxu0 0.0
    %479 = vmatprep.subr.mxu0 0.0
    %480 = vmatpush1.msra.mxu0 0.0
    %481 = vmatprep.subr.mxu0 0.0
    %482 = vmatpush1.msra.mxu0 0.0
    %483 = vmatprep.subr.mxu0 0.0
    %484 = vmatpush1.msra.mxu0 0.0
    %485 = vmatprep.subr.mxu0 0.0
    %486 = vmatpush1.msra.mxu0 0.0
    %487 = vmatprep.subr.mxu0 0.0
    %488 = vmatpush1.msra.mxu0 0.0
    %489 = vmatprep.subr.mxu0 0.0
    %490 = vmatpush1.msra.mxu0 0.0
    %491 = vmatprep.subr.mxu0 0.0
    %492 = vmatpush1.msra.mxu0 0.0
    %493 = vmatprep.mubr.f32.mxu0 0.0
    %494 = vmatmul.mubr.f32.gmra.mrb[0].mxu0 %v424
    %v495 = vpop.f32.mrb[0].mxu0
    %v496 = vadd.f32 %v421, %v495
    %v497 = vpop.f32.mrb[0].mxu0
    %498 = vmatprep.mubr.f32.mxu0 0.0
    %499 = vmatmul.mubr.f32.gmra.mrb[0].mxu0 %v427
    %v500 = vpop.f32.mrb[0].mxu0
    %v501 = vadd.f32 %v421, %v500
    %v502 = vpop.f32.mrb[0].mxu0
    %503 = vdwg.mxu0
    %v504 = vmax.f32 %v496, 0.0
    %v505 = vmax.f32 %v501, 0.0
    %v506 = vld [vmem:[#allocation5] sm:$0xff]
    %v507 = vld [vmem:[#allocation5 + $0x8] sm:$0xff]
    %v508 = vld [vmem:[#allocation5 + $0x10] sm:$0xff]
    %v509 = vld [vmem:[#allocation5 + $0x18] sm:$0xff]
    %v511 = vsel %vm334, %v504, 0
    %v514 = vsel %vm334, %v505, 0
    %516 = vmatprep.subr.mxu0 0.0
    %517 = vmatpush1.msra.mxu0 %v506
    %518 = vmatprep.subr.mxu0 0.0
    %519 = vmatpush1.msra.mxu0 %v507
    %520 = vmatprep.subr.mxu0 0.0
    %521 = vmatpush1.msra.mxu0 %v508
    %522 = vmatprep.subr.mxu0 0.0
    %523 = vmatpush1.msra.mxu0 %v509
    %524 = vmatprep.subr.mxu0 0.0
    %525 = vmatpush1.msra.mxu0 0.0
    %526 = vmatprep.subr.mxu0 0.0
    %527 = vmatpush1.msra.mxu0 0.0
    %528 = vmatprep.subr.mxu0 0.0
    %529 = vmatpush1.msra.mxu0 0.0
    %530 = vmatprep.subr.mxu0 0.0
    %531 = vmatpush1.msra.mxu0 0.0
    %532 = vmatprep.subr.mxu0 0.0
    %533 = vmatpush1.msra.mxu0 0.0
    %534 = vmatprep.subr.mxu0 0.0
    %535 = vmatpush1.msra.mxu0 0.0
    %536 = vmatprep.subr.mxu0 0.0
    %537 = vmatpush1.msra.mxu0 0.0
    %538 = vmatprep.subr.mxu0 0.0
    %539 = vmatpush1.msra.mxu0 0.0
    %540 = vmatprep.subr.mxu0 0.0
    %541 = vmatpush1.msra.mxu0 0.0
    %542 = vmatprep.subr.mxu0 0.0
    %543 = vmatpush1.msra.mxu0 0.0
    %544 = vmatprep.subr.mxu0 0.0
    %545 = vmatpush1.msra.mxu0 0.0
    %546 = vmatprep.subr.mxu0 0.0
    %547 = vmatpush1.msra.mxu0 0.0
    %548 = vmatprep.subr.mxu0 0.0
    %549 = vmatpush1.msra.mxu0 0.0
    %550 = vmatprep.subr.mxu0 0.0
    %551 = vmatpush1.msra.mxu0 0.0
    %552 = vmatprep.subr.mxu0 0.0
    %553 = vmatpush1.msra.mxu0 0.0
    %554 = vmatprep.subr.mxu0 0.0
    %555 = vmatpush1.msra.mxu0 0.0
    %556 = vmatprep.subr.mxu0 0.0
    %557 = vmatpush1.msra.mxu0 0.0
    %558 = vmatprep.subr.mxu0 0.0
    %559 = vmatpush1.msra.mxu0 0.0
    %560 = vmatprep.subr.mxu0 0.0
    %561 = vmatpush1.msra.mxu0 0.0
    %562 = vmatprep.subr.mxu0 0.0
    %563 = vmatpush1.msra.mxu0 0.0
    %564 = vmatprep.subr.mxu0 0.0
    %565 = vmatpush1.msra.mxu0 0.0
    %566 = vmatprep.subr.mxu0 0.0
    %567 = vmatpush1.msra.mxu0 0.0
    %568 = vmatprep.subr.mxu0 0.0
    %569 = vmatpush1.msra.mxu0 0.0
    %570 = vmatprep.subr.mxu0 0.0
    %571 = vmatpush1.msra.mxu0 0.0
    %572 = vmatprep.subr.mxu0 0.0
    %573 = vmatpush1.msra.mxu0 0.0
    %574 = vmatprep.subr.mxu0 0.0
    %575 = vmatpush1.msra.mxu0 0.0
    %576 = vmatprep.subr.mxu0 0.0
    %577 = vmatpush1.msra.mxu0 0.0
    %578 = vmatprep.subr.mxu0 0.0
    %579 = vmatpush1.msra.mxu0 0.0
    %580 = vmatprep.mubr.f32.mxu0 0.0
    %581 = vmatmul.mubr.f32.gmra.mrb[0].mxu0 %v511
    %v582 = vpop.f32.mrb[0].mxu0
    %v583 = vadd.f32 0.0, %v582
    %v584 = vpop.f32.mrb[0].mxu0
    %585 = vmatprep.mubr.f32.mxu0 0.0
    %586 = vmatmul.mubr.f32.gmra.mrb[0].mxu0 %v514
    %v587 = vpop.f32.mrb[0].mxu0
    %v588 = vadd.f32 0.0, %v587
    %v589 = vpop.f32.mrb[0].mxu0
    %590 = vdwg.mxu0
    %v591 = vld [vmem:[#allocation7] sm:$0x1]
    %v593 = vlaneseq
    %v594 = vshrl.u32 %v593, 7
    %v595 = vsub.s32 0, %v594
    %v596 = vrot.slane %v591, %v595
    %598 = vmatprep.subr.mxu0 0.0
    %599 = vmatpush1.msra.mxu0 %v583
    %600 = vmatprep.subr.mxu0 0.0
    %601 = vmatpush1.msra.mxu0 %v588
    %602 = vmatprep.subr.mxu0 0.0
    %603 = vmatpush1.msra.mxu0 0.0
    %604 = vmatprep.subr.mxu0 0.0
    %605 = vmatpush1.msra.mxu0 0.0
    %606 = vmatprep.subr.mxu0 0.0
    %607 = vmatpush1.msra.mxu0 0.0
    %608 = vmatprep.subr.mxu0 0.0
    %609 = vmatpush1.msra.mxu0 0.0
    %610 = vmatprep.subr.mxu0 0.0
    %611 = vmatpush1.msra.mxu0 0.0
    %612 = vmatprep.subr.mxu0 0.0
    %613 = vmatpush1.msra.mxu0 0.0
    %614 = vmatprep.subr.mxu0 0.0
    %615 = vmatpush1.msra.mxu0 0.0
    %616 = vmatprep.subr.mxu0 0.0
    %617 = vmatpush1.msra.mxu0 0.0
    %618 = vmatprep.subr.mxu0 0.0
    %619 = vmatpush1.msra.mxu0 0.0
    %620 = vmatprep.subr.mxu0 0.0
    %621 = vmatpush1.msra.mxu0 0.0
    %622 = vmatprep.subr.mxu0 0.0
    %623 = vmatpush1.msra.mxu0 0.0
    %624 = vmatprep.subr.mxu0 0.0
    %625 = vmatpush1.msra.mxu0 0.0
    %626 = vmatprep.subr.mxu0 0.0
    %627 = vmatpush1.msra.mxu0 0.0
    %628 = vmatprep.subr.mxu0 0.0
    %629 = vmatpush1.msra.mxu0 0.0
    %630 = vmatprep.subr.mxu0 0.0
    %631 = vmatpush1.msra.mxu0 0.0
    %632 = vmatprep.subr.mxu0 0.0
    %633 = vmatpush1.msra.mxu0 0.0
    %634 = vmatprep.subr.mxu0 0.0
    %635 = vmatpush1.msra.mxu0 0.0
    %636 = vmatprep.subr.mxu0 0.0
    %637 = vmatpush1.msra.mxu0 0.0
    %638 = vmatprep.subr.mxu0 0.0
    %639 = vmatpush1.msra.mxu0 0.0
    %640 = vmatprep.subr.mxu0 0.0
    %641 = vmatpush1.msra.mxu0 0.0
    %642 = vmatprep.subr.mxu0 0.0
    %643 = vmatpush1.msra.mxu0 0.0
    %644 = vmatprep.subr.mxu0 0.0
    %645 = vmatpush1.msra.mxu0 0.0
    %646 = vmatprep.subr.mxu0 0.0
    %647 = vmatpush1.msra.mxu0 0.0
    %648 = vmatprep.subr.mxu0 0.0
    %649 = vmatpush1.msra.mxu0 0.0
    %650 = vmatprep.subr.mxu0 0.0
    %651 = vmatpush1.msra.mxu0 0.0
    %652 = vmatprep.subr.mxu0 0.0
    %653 = vmatpush1.msra.mxu0 0.0
    %654 = vmatprep.subr.mxu0 0.0
    %655 = vmatpush1.msra.mxu0 0.0
    %656 = vmatprep.subr.mxu0 0.0
    %657 = vmatpush1.msra.mxu0 0.0
    %658 = vmatprep.subr.mxu0 0.0
    %659 = vmatpush1.msra.mxu0 0.0
    %660 = vmatprep.subr.mxu0 0.0
    %661 = vmatpush1.msra.mxu0 0.0
    %662 = vmatprep.mubr.f32.mxu0 0.0
    %663 = vmatmul.mubr.f32.gmra.mrb[0].mxu0 %v424
    %v664 = vpop.f32.mrb[0].mxu0
    %v665 = vadd.f32 %v596, %v664
    %v666 = vpop.f32.mrb[0].mxu0
    %667 = vmatprep.mubr.f32.mxu0 0.0
    %668 = vmatmul.mubr.f32.gmra.mrb[0].mxu0 %v427
    %v669 = vpop.f32.mrb[0].mxu0
    %v670 = vadd.f32 %v596, %v669
    %v671 = vpop.f32.mrb[0].mxu0
    %672 = vdwg.mxu0
    %v673 = vmax.f32 %v665, 0.0
    %v674 = vmax.f32 %v670, 0.0
    %v675 = vld [vmem:[#allocation2] sm:$0xff]
    %v676 = vld [vmem:[#allocation2 + $0x8] sm:$0xf]
    %v677 = vld [vmem:[#allocation8] sm:$0xff]
    %v678 = vld [vmem:[#allocation8 + $0x8] sm:$0xff]
    %v679 = vld [vmem:[#allocation8 + $0x10] sm:$0xff]
    %v680 = vld [vmem:[#allocation8 + $0x18] sm:$0xff]
    %v682 = vsel %vm334, %v675, 0
    %v685 = vsel %vm334, %v676, 0
    %687 = vmatprep.subr.mxu0 0.0
    %688 = vmatpush1.msra.mxu0 %v677
    %689 = vmatprep.subr.mxu0 0.0
    %690 = vmatpush1.msra.mxu0 %v678
    %691 = vmatprep.subr.mxu0 0.0
    %692 = vmatpush1.msra.mxu0 %v679
    %693 = vmatprep.subr.mxu0 0.0
    %694 = vmatpush1.msra.mxu0 %v680
    %695 = vmatprep.subr.mxu0 0.0
    %696 = vmatpush1.msra.mxu0 0.0
    %697 = vmatprep.subr.mxu0 0.0
    %698 = vmatpush1.msra.mxu0 0.0
    %699 = vmatprep.subr.mxu0 0.0
    %700 = vmatpush1.msra.mxu0 0.0
    %701 = vmatprep.subr.mxu0 0.0
    %702 = vmatpush1.msra.mxu0 0.0
    %703 = vmatprep.subr.mxu0 0.0
    %704 = vmatpush1.msra.mxu0 0.0
    %705 = vmatprep.subr.mxu0 0.0
    %706 = vmatpush1.msra.mxu0 0.0
    %707 = vmatprep.subr.mxu0 0.0
    %708 = vmatpush1.msra.mxu0 0.0
    %709 = vmatprep.subr.mxu0 0.0
    %710 = vmatpush1.msra.mxu0 0.0
    %711 = vmatprep.subr.mxu0 0.0
    %712 = vmatpush1.msra.mxu0 0.0
    %713 = vmatprep.subr.mxu0 0.0
    %714 = vmatpush1.msra.mxu0 0.0
    %715 = vmatprep.subr.mxu0 0.0
    %716 = vmatpush1.msra.mxu0 0.0
    %717 = vmatprep.subr.mxu0 0.0
    %718 = vmatpush1.msra.mxu0 0.0
    %719 = vmatprep.subr.mxu0 0.0
    %720 = vmatpush1.msra.mxu0 0.0
    %721 = vmatprep.subr.mxu0 0.0
    %722 = vmatpush1.msra.mxu0 0.0
    %723 = vmatprep.subr.mxu0 0.0
    %724 = vmatpush1.msra.mxu0 0.0
    %725 = vmatprep.subr.mxu0 0.0
    %726 = vmatpush1.msra.mxu0 0.0
    %727 = vmatprep.subr.mxu0 0.0
    %728 = vmatpush1.msra.mxu0 0.0
    %729 = vmatprep.subr.mxu0 0.0
    %730 = vmatpush1.msra.mxu0 0.0
    %731 = vmatprep.subr.mxu0 0.0
    %732 = vmatpush1.msra.mxu0 0.0
    %733 = vmatprep.subr.mxu0 0.0
    %734 = vmatpush1.msra.mxu0 0.0
    %735 = vmatprep.subr.mxu0 0.0
    %736 = vmatpush1.msra.mxu0 0.0
    %737 = vmatprep.subr.mxu0 0.0
    %738 = vmatpush1.msra.mxu0 0.0
    %739 = vmatprep.subr.mxu0 0.0
    %740 = vmatpush1.msra.mxu0 0.0
    %741 = vmatprep.subr.mxu0 0.0
    %742 = vmatpush1.msra.mxu0 0.0
    %743 = vmatprep.subr.mxu0 0.0
    %744 = vmatpush1.msra.mxu0 0.0
    %745 = vmatprep.subr.mxu0 0.0
    %746 = vmatpush1.msra.mxu0 0.0
    %747 = vmatprep.subr.mxu0 0.0
    %748 = vmatpush1.msra.mxu0 0.0
    %749 = vmatprep.subr.mxu0 0.0
    %750 = vmatpush1.msra.mxu0 0.0
    %751 = vmatprep.mubr.f32.mxu0 0.0
    %752 = vmatmul.mubr.f32.gmra.mrb[0].mxu0 %v682
    %v753 = vpop.f32.mrb[0].mxu0
    %v754 = vadd.f32 0.0, %v753
    %v755 = vpop.f32.mrb[0].mxu0
    %756 = vmatprep.mubr.f32.mxu0 0.0
    %757 = vmatmul.mubr.f32.gmra.mrb[0].mxu0 %v685
    %v758 = vpop.f32.mrb[0].mxu0
    %v759 = vadd.f32 0.0, %v758
    %v760 = vpop.f32.mrb[0].mxu0
    %761 = vdwg.mxu0
    %v762 = vld [vmem:[#allocation10] sm:$0x1]
    %v764 = vlaneseq
    %v765 = vshrl.u32 %v764, 7
    %v766 = vsub.s32 0, %v765
    %v767 = vrot.slane %v762, %v766
    %v770 = vsel %vm300, %v326, 0
    %v773 = vsel %vm300, %v327, 0
    %vm775 = vcmask 1043456
    %v777 = vsel %vm775, %v759, 0
    %779 = vmatprep.subr.mxu0 0.0
    %780 = vmatpush1.msra.mxu0 %v754
    %781 = vmatprep.subr.mxu0 0.0
    %782 = vmatpush1.msra.mxu0 %v777
    %783 = vmatprep.subr.mxu0 0.0
    %784 = vmatpush1.msra.mxu0 0.0
    %785 = vmatprep.subr.mxu0 0.0
    %786 = vmatpush1.msra.mxu0 0.0
    %787 = vmatprep.subr.mxu0 0.0
    %788 = vmatpush1.msra.mxu0 0.0
    %789 = vmatprep.subr.mxu0 0.0
    %790 = vmatpush1.msra.mxu0 0.0
    %791 = vmatprep.subr.mxu0 0.0
    %792 = vmatpush1.msra.mxu0 0.0
    %793 = vmatprep.subr.mxu0 0.0
    %794 = vmatpush1.msra.mxu0 0.0
    %795 = vmatprep.subr.mxu0 0.0
    %796 = vmatpush1.msra.mxu0 0.0
    %797 = vmatprep.subr.mxu0 0.0
    %798 = vmatpush1.msra.mxu0 0.0
    %799 = vmatprep.subr.mxu0 0.0
    %800 = vmatpush1.msra.mxu0 0.0
    %801 = vmatprep.subr.mxu0 0.0
    %802 = vmatpush1.msra.mxu0 0.0
    %803 = vmatprep.subr.mxu0 0.0
    %804 = vmatpush1.msra.mxu0 0.0
    %805 = vmatprep.subr.mxu0 0.0
    %806 = vmatpush1.msra.mxu0 0.0
    %807 = vmatprep.subr.mxu0 0.0
    %808 = vmatpush1.msra.mxu0 0.0
    %809 = vmatprep.subr.mxu0 0.0
    %810 = vmatpush1.msra.mxu0 0.0
    %811 = vmatprep.subr.mxu0 0.0
    %812 = vmatpush1.msra.mxu0 0.0
    %813 = vmatprep.subr.mxu0 0.0
    %814 = vmatpush1.msra.mxu0 0.0
    %815 = vmatprep.subr.mxu0 0.0
    %816 = vmatpush1.msra.mxu0 0.0
    %817 = vmatprep.subr.mxu0 0.0
    %818 = vmatpush1.msra.mxu0 0.0
    %819 = vmatprep.subr.mxu0 0.0
    %820 = vmatpush1.msra.mxu0 0.0
    %821 = vmatprep.subr.mxu0 0.0
    %822 = vmatpush1.msra.mxu0 0.0
    %823 = vmatprep.subr.mxu0 0.0
    %824 = vmatpush1.msra.mxu0 0.0
    %825 = vmatprep.subr.mxu0 0.0
    %826 = vmatpush1.msra.mxu0 0.0
    %827 = vmatprep.subr.mxu0 0.0
    %828 = vmatpush1.msra.mxu0 0.0
    %829 = vmatprep.subr.mxu0 0.0
    %830 = vmatpush1.msra.mxu0 0.0
    %831 = vmatprep.subr.mxu0 0.0
    %832 = vmatpush1.msra.mxu0 0.0
    %833 = vmatprep.subr.mxu0 0.0
    %834 = vmatpush1.msra.mxu0 0.0
    %835 = vmatprep.subr.mxu0 0.0
    %836 = vmatpush1.msra.mxu0 0.0
    %837 = vmatprep.subr.mxu0 0.0
    %838 = vmatpush1.msra.mxu0 0.0
    %839 = vmatprep.subr.mxu0 0.0
    %840 = vmatpush1.msra.mxu0 0.0
    %841 = vmatprep.subr.mxu0 0.0
    %842 = vmatpush1.msra.mxu0 0.0
    %843 = vmatprep.mubr.f32.mxu0 0.0
    %844 = vmatmul.mubr.f32.gmra.mrb[0].mxu0 %v770
    %v845 = vpop.f32.mrb[0].mxu0
    %v846 = vadd.f32 %v767, %v845
    %v847 = vpop.f32.mrb[0].mxu0
    %848 = vmatprep.mubr.f32.mxu0 0.0
    %849 = vmatmul.mubr.f32.gmra.mrb[0].mxu0 %v773
    %v850 = vpop.f32.mrb[0].mxu0
    %v851 = vadd.f32 %v767, %v850
    %v852 = vpop.f32.mrb[0].mxu0
    %853 = vdwg.mxu0
    %v854 = vmax.f32 %v846, 0.0
    %v855 = vmax.f32 %v851, 0.0
    %v856 = vld [vmem:[#allocation11] sm:$0xff]
    %v857 = vld [vmem:[#allocation11 + $0x8] sm:$0xff]
    %v858 = vld [vmem:[#allocation11 + $0x10] sm:$0xff]
    %v859 = vld [vmem:[#allocation11 + $0x18] sm:$0xff]
    %v861 = vsel %vm334, %v854, 0
    %v864 = vsel %vm334, %v855, 0
    %866 = vmatprep.subr.mxu0 0.0
    %867 = vmatpush1.msra.mxu0 %v856
    %868 = vmatprep.subr.mxu0 0.0
    %869 = vmatpush1.msra.mxu0 %v857
    %870 = vmatprep.subr.mxu0 0.0
    %871 = vmatpush1.msra.mxu0 %v858
    %872 = vmatprep.subr.mxu0 0.0
    %873 = vmatpush1.msra.mxu0 %v859
    %874 = vmatprep.subr.mxu0 0.0
    %875 = vmatpush1.msra.mxu0 0.0
    %876 = vmatprep.subr.mxu0 0.0
    %877 = vmatpush1.msra.mxu0 0.0
    %878 = vmatprep.subr.mxu0 0.0
    %879 = vmatpush1.msra.mxu0 0.0
    %880 = vmatprep.subr.mxu0 0.0
    %881 = vmatpush1.msra.mxu0 0.0
    %882 = vmatprep.subr.mxu0 0.0
    %883 = vmatpush1.msra.mxu0 0.0
    %884 = vmatprep.subr.mxu0 0.0
    %885 = vmatpush1.msra.mxu0 0.0
    %886 = vmatprep.subr.mxu0 0.0
    %887 = vmatpush1.msra.mxu0 0.0
    %888 = vmatprep.subr.mxu0 0.0
    %889 = vmatpush1.msra.mxu0 0.0
    %890 = vmatprep.subr.mxu0 0.0
    %891 = vmatpush1.msra.mxu0 0.0
    %892 = vmatprep.subr.mxu0 0.0
    %893 = vmatpush1.msra.mxu0 0.0
    %894 = vmatprep.subr.mxu0 0.0
    %895 = vmatpush1.msra.mxu0 0.0
    %896 = vmatprep.subr.mxu0 0.0
    %897 = vmatpush1.msra.mxu0 0.0
    %898 = vmatprep.subr.mxu0 0.0
    %899 = vmatpush1.msra.mxu0 0.0
    %900 = vmatprep.subr.mxu0 0.0
    %901 = vmatpush1.msra.mxu0 0.0
    %902 = vmatprep.subr.mxu0 0.0
    %903 = vmatpush1.msra.mxu0 0.0
    %904 = vmatprep.subr.mxu0 0.0
    %905 = vmatpush1.msra.mxu0 0.0
    %906 = vmatprep.subr.mxu0 0.0
    %907 = vmatpush1.msra.mxu0 0.0
    %908 = vmatprep.subr.mxu0 0.0
    %909 = vmatpush1.msra.mxu0 0.0
    %910 = vmatprep.subr.mxu0 0.0
    %911 = vmatpush1.msra.mxu0 0.0
    %912 = vmatprep.subr.mxu0 0.0
    %913 = vmatpush1.msra.mxu0 0.0
    %914 = vmatprep.subr.mxu0 0.0
    %915 = vmatpush1.msra.mxu0 0.0
    %916 = vmatprep.subr.mxu0 0.0
    %917 = vmatpush1.msra.mxu0 0.0
    %918 = vmatprep.subr.mxu0 0.0
    %919 = vmatpush1.msra.mxu0 0.0
    %920 = vmatprep.subr.mxu0 0.0
    %921 = vmatpush1.msra.mxu0 0.0
    %922 = vmatprep.subr.mxu0 0.0
    %923 = vmatpush1.msra.mxu0 0.0
    %924 = vmatprep.subr.mxu0 0.0
    %925 = vmatpush1.msra.mxu0 0.0
    %926 = vmatprep.subr.mxu0 0.0
    %927 = vmatpush1.msra.mxu0 0.0
    %928 = vmatprep.subr.mxu0 0.0
    %929 = vmatpush1.msra.mxu0 0.0
    %930 = vmatprep.mubr.f32.mxu0 0.0
    %931 = vmatmul.mubr.f32.gmra.mrb[0].mxu0 %v861
    %v932 = vpop.f32.mrb[0].mxu0
    %v933 = vadd.f32 0.0, %v932
    %v934 = vpop.f32.mrb[0].mxu0
    %935 = vmatprep.mubr.f32.mxu0 0.0
    %936 = vmatmul.mubr.f32.gmra.mrb[0].mxu0 %v864
    %v937 = vpop.f32.mrb[0].mxu0
    %v938 = vadd.f32 0.0, %v937
    %v939 = vpop.f32.mrb[0].mxu0
    %940 = vdwg.mxu0
    %v941 = vld [vmem:[#allocation13] sm:$0x1]
    %v943 = vlaneseq
    %v944 = vshrl.u32 %v943, 7
    %v945 = vsub.s32 0, %v944
    %v946 = vrot.slane %v941, %v945
    %v949 = vsel %vm775, %v938, 0
    %951 = vmatprep.subr.mxu0 0.0
    %952 = vmatpush1.msra.mxu0 %v933
    %953 = vmatprep.subr.mxu0 0.0
    %954 = vmatpush1.msra.mxu0 %v949
    %955 = vmatprep.subr.mxu0 0.0
    %956 = vmatpush1.msra.mxu0 0.0
    %957 = vmatprep.subr.mxu0 0.0
    %958 = vmatpush1.msra.mxu0 0.0
    %959 = vmatprep.subr.mxu0 0.0
    %960 = vmatpush1.msra.mxu0 0.0
    %961 = vmatprep.subr.mxu0 0.0
    %962 = vmatpush1.msra.mxu0 0.0
    %963 = vmatprep.subr.mxu0 0.0
    %964 = vmatpush1.msra.mxu0 0.0
    %965 = vmatprep.subr.mxu0 0.0
    %966 = vmatpush1.msra.mxu0 0.0
    %967 = vmatprep.subr.mxu0 0.0
    %968 = vmatpush1.msra.mxu0 0.0
    %969 = vmatprep.subr.mxu0 0.0
    %970 = vmatpush1.msra.mxu0 0.0
    %971 = vmatprep.subr.mxu0 0.0
    %972 = vmatpush1.msra.mxu0 0.0
    %973 = vmatprep.subr.mxu0 0.0
    %974 = vmatpush1.msra.mxu0 0.0
    %975 = vmatprep.subr.mxu0 0.0
    %976 = vmatpush1.msra.mxu0 0.0
    %977 = vmatprep.subr.mxu0 0.0
    %978 = vmatpush1.msra.mxu0 0.0
    %979 = vmatprep.subr.mxu0 0.0
    %980 = vmatpush1.msra.mxu0 0.0
    %981 = vmatprep.subr.mxu0 0.0
    %982 = vmatpush1.msra.mxu0 0.0
    %983 = vmatprep.subr.mxu0 0.0
    %984 = vmatpush1.msra.mxu0 0.0
    %985 = vmatprep.subr.mxu0 0.0
    %986 = vmatpush1.msra.mxu0 0.0
    %987 = vmatprep.subr.mxu0 0.0
    %988 = vmatpush1.msra.mxu0 0.0
    %989 = vmatprep.subr.mxu0 0.0
    %990 = vmatpush1.msra.mxu0 0.0
    %991 = vmatprep.subr.mxu0 0.0
    %992 = vmatpush1.msra.mxu0 0.0
    %993 = vmatprep.subr.mxu0 0.0
    %994 = vmatpush1.msra.mxu0 0.0
    %995 = vmatprep.subr.mxu0 0.0
    %996 = vmatpush1.msra.mxu0 0.0
    %997 = vmatprep.subr.mxu0 0.0
    %998 = vmatpush1.msra.mxu0 0.0
    %999 = vmatprep.subr.mxu0 0.0
    %1000 = vmatpush1.msra.mxu0 0.0
    %1001 = vmatprep.subr.mxu0 0.0
    %1002 = vmatpush1.msra.mxu0 0.0
    %1003 = vmatprep.subr.mxu0 0.0
    %1004 = vmatpush1.msra.mxu0 0.0
    %1005 = vmatprep.subr.mxu0 0.0
    %1006 = vmatpush1.msra.mxu0 0.0
    %1007 = vmatprep.subr.mxu0 0.0
    %1008 = vmatpush1.msra.mxu0 0.0
    %1009 = vmatprep.subr.mxu0 0.0
    %1010 = vmatpush1.msra.mxu0 0.0
    %1011 = vmatprep.subr.mxu0 0.0
    %1012 = vmatpush1.msra.mxu0 0.0
    %1013 = vmatprep.subr.mxu0 0.0
    %1014 = vmatpush1.msra.mxu0 0.0
    %1015 = vmatprep.mubr.f32.mxu0 0.0
    %1016 = vmatmul.mubr.f32.gmra.mrb[0].mxu0 %v770
    %v1017 = vpop.f32.mrb[0].mxu0
    %v1018 = vadd.f32 %v946, %v1017
    %v1019 = vpop.f32.mrb[0].mxu0
    %1020 = vmatprep.mubr.f32.mxu0 0.0
    %1021 = vmatmul.mubr.f32.gmra.mrb[0].mxu0 %v773
    %v1022 = vpop.f32.mrb[0].mxu0
    %v1023 = vadd.f32 %v946, %v1022
    %v1024 = vpop.f32.mrb[0].mxu0
    %1025 = vdwg.mxu0
    %v1026 = vmax.f32 %v1018, 0.0
    %v1027 = vmax.f32 %v1023, 0.0
    %v1028 = vld [vmem:[%s12] sm:$0xff]
    %v1029 = vld [vmem:[%s12 + $0x8] sm:$0xff]
    %v1030 = vld [vmem:[%s12 + $0x10] sm:$0xff]
    %v1031 = vld [vmem:[%s12 + $0x18] sm:$0xff]
    %v1032 = vld [vmem:[%s12 + $0x20] sm:$0xff]
    %v1033 = vld [vmem:[%s12 + $0x28] sm:$0xff]
    %v1034 = vld [vmem:[%s12 + $0x30] sm:$0xff]
    %v1035 = vld [vmem:[%s12 + $0x38] sm:$0xff]
    %v1036 = vld [vmem:[%s13] sm:$0x3]
    %v1038 = vlaneseq
    %v1039 = vshrl.u32 %v1038, 7
    %v1040 = vsub.s32 0, %v1039
    %v1041 = vrot.slane %v1036, %v1040
    %v1042 = vlaneseq
    %v1043 = vshrl.u32 %v1042, 7
    %v1044 = vsub.s32 1, %v1043
    %v1045 = vrot.slane %v1036, %v1044
    %v1049 = vsel %vm334, %v673, 0
    %v1052 = vsel %vm334, %v674, 0
    %1054 = vmatprep.subr.mxu0 %v1029
    %1055 = vmatpush1.msra.mxu0 %v1028
    %1056 = vmatprep.subr.mxu0 %v1031
    %1057 = vmatpush1.msra.mxu0 %v1030
    %1058 = vmatprep.subr.mxu0 %v1033
    %1059 = vmatpush1.msra.mxu0 %v1032
    %1060 = vmatprep.subr.mxu0 %v1035
    %1061 = vmatpush1.msra.mxu0 %v1034
    %1062 = vmatprep.subr.mxu0 0.0
    %1063 = vmatpush1.msra.mxu0 0.0
    %1064 = vmatprep.subr.mxu0 0.0
    %1065 = vmatpush1.msra.mxu0 0.0
    %1066 = vmatprep.subr.mxu0 0.0
    %1067 = vmatpush1.msra.mxu0 0.0
    %1068 = vmatprep.subr.mxu0 0.0
    %1069 = vmatpush1.msra.mxu0 0.0
    %1070 = vmatprep.subr.mxu0 0.0
    %1071 = vmatpush1.msra.mxu0 0.0
    %1072 = vmatprep.subr.mxu0 0.0
    %1073 = vmatpush1.msra.mxu0 0.0
    %1074 = vmatprep.subr.mxu0 0.0
    %1075 = vmatpush1.msra.mxu0 0.0
    %1076 = vmatprep.subr.mxu0 0.0
    %1077 = vmatpush1.msra.mxu0 0.0
    %1078 = vmatprep.subr.mxu0 0.0
    %1079 = vmatpush1.msra.mxu0 0.0
    %1080 = vmatprep.subr.mxu0 0.0
    %1081 = vmatpush1.msra.mxu0 0.0
    %1082 = vmatprep.subr.mxu0 0.0
    %1083 = vmatpush1.msra.mxu0 0.0
    %1084 = vmatprep.subr.mxu0 0.0
    %1085 = vmatpush1.msra.mxu0 0.0
    %1086 = vmatprep.subr.mxu0 0.0
    %1087 = vmatpush1.msra.mxu0 0.0
    %1088 = vmatprep.subr.mxu0 0.0
    %1089 = vmatpush1.msra.mxu0 0.0
    %1090 = vmatprep.subr.mxu0 0.0
    %1091 = vmatpush1.msra.mxu0 0.0
    %1092 = vmatprep.subr.mxu0 0.0
    %1093 = vmatpush1.msra.mxu0 0.0
    %1094 = vmatprep.subr.mxu0 0.0
    %1095 = vmatpush1.msra.mxu0 0.0
    %1096 = vmatprep.subr.mxu0 0.0
    %1097 = vmatpush1.msra.mxu0 0.0
    %1098 = vmatprep.subr.mxu0 0.0
    %1099 = vmatpush1.msra.mxu0 0.0
    %1100 = vmatprep.subr.mxu0 0.0
    %1101 = vmatpush1.msra.mxu0 0.0
    %1102 = vmatprep.subr.mxu0 0.0
    %1103 = vmatpush1.msra.mxu0 0.0
    %1104 = vmatprep.subr.mxu0 0.0
    %1105 = vmatpush1.msra.mxu0 0.0
    %1106 = vmatprep.subr.mxu0 0.0
    %1107 = vmatpush1.msra.mxu0 0.0
    %1108 = vmatprep.subr.mxu0 0.0
    %1109 = vmatpush1.msra.mxu0 0.0
    %1110 = vmatprep.subr.mxu0 0.0
    %1111 = vmatpush1.msra.mxu0 0.0
    %1112 = vmatprep.subr.mxu0 0.0
    %1113 = vmatpush1.msra.mxu0 0.0
    %1114 = vmatprep.subr.mxu0 0.0
    %1115 = vmatpush1.msra.mxu0 0.0
    %1116 = vmatprep.subr.mxu0 0.0
    %1117 = vmatpush1.msra.mxu0 0.0
    %1118 = vmatprep.mubr.f32.mxu0 0.0
    %1119 = vmatmul.mubr.f32.gmra.mrb[0].mxu0 %v1049
    %v1120 = vpop.f32.mrb[0].mxu0
    %v1121 = vadd.f32 %v1041, %v1120
    %v1122 = vpop.f32.mrb[0].mxu0
    %v1123 = vadd.f32 %v1045, %v1122
    %1124 = vmatprep.mubr.f32.mxu0 0.0
    %1125 = vmatmul.mubr.f32.gmra.mrb[0].mxu0 %v1052
    %v1126 = vpop.f32.mrb[0].mxu0
    %v1127 = vadd.f32 %v1041, %v1126
    %v1128 = vpop.f32.mrb[0].mxu0
    %v1129 = vadd.f32 %v1045, %v1128
    %1130 = vdwg.mxu0
    %v1131 = vmax.f32 %v1121, 0.0
    %v1132 = vmax.f32 %v1123, 0.0
    %v1133 = vmax.f32 %v1127, 0.0
    %v1134 = vmax.f32 %v1129, 0.0
    %v1135 = vld [vmem:[%s14] sm:$0xff]
    %v1136 = vld [vmem:[%s14 + $0x8] sm:$0xff]
    %v1137 = vld [vmem:[%s14 + $0x10] sm:$0xff]
    %v1138 = vld [vmem:[%s14 + $0x18] sm:$0xff]
    %v1139 = vld [vmem:[%s14 + $0x20] sm:$0xff]
    %v1140 = vld [vmem:[%s14 + $0x28] sm:$0xff]
    %v1141 = vld [vmem:[%s14 + $0x30] sm:$0xff]
    %v1142 = vld [vmem:[%s14 + $0x38] sm:$0xff]
    %v1143 = vld [vmem:[%s14 + $0x40] sm:$0xff]
    %v1144 = vld [vmem:[%s14 + $0x48] sm:$0xff]
    %v1145 = vld [vmem:[%s14 + $0x50] sm:$0xff]
    %v1146 = vld [vmem:[%s14 + $0x58] sm:$0xff]
    %v1147 = vld [vmem:[%s14 + $0x60] sm:$0xff]
    %v1148 = vld [vmem:[%s14 + $0x68] sm:$0xff]
    %v1149 = vld [vmem:[%s14 + $0x70] sm:$0xff]
    %v1150 = vld [vmem:[%s14 + $0x78] sm:$0xff]
    %v1151 = vld [vmem:[%s14 + $0x80] sm:$0xff]
    %v1152 = vld [vmem:[%s14 + $0x88] sm:$0xff]
    %v1153 = vld [vmem:[%s14 + $0x90] sm:$0xff]
    %v1154 = vld [vmem:[%s14 + $0x98] sm:$0xff]
    %v1155 = vld [vmem:[%s14 + $0xa0] sm:$0xff]
    %v1156 = vld [vmem:[%s14 + $0xa8] sm:$0xff]
    %v1157 = vld [vmem:[%s14 + $0xb0] sm:$0xff]
    %v1158 = vld [vmem:[%s14 + $0xb8] sm:$0xff]
    %v1159 = vld [vmem:[%s14 + $0xc0] sm:$0xff]
    %v1160 = vld [vmem:[%s14 + $0xc8] sm:$0xff]
    %v1161 = vld [vmem:[%s14 + $0xd0] sm:$0xff]
    %v1162 = vld [vmem:[%s14 + $0xd8] sm:$0xff]
    %v1163 = vld [vmem:[%s14 + $0xe0] sm:$0xff]
    %v1164 = vld [vmem:[%s14 + $0xe8] sm:$0xff]
    %v1165 = vld [vmem:[%s14 + $0xf0] sm:$0xff]
    %v1166 = vld [vmem:[%s14 + $0xf8] sm:$0xff]
    %v1167 = vld [vmem:[#allocation14] sm:$0x1]
    %v1169 = vlaneseq
    %v1170 = vshrl.u32 %v1169, 7
    %v1171 = vsub.s32 0, %v1170
    %v1172 = vrot.slane %v1167, %v1171
    %1174 = vmatprep.subr.mxu0 0.0
    %1175 = vmatpush1.msra.mxu0 %v1135
    %1176 = vmatprep.subr.mxu0 0.0
    %1177 = vmatpush1.msra.mxu0 %v1136
    %1178 = vmatprep.subr.mxu0 0.0
    %1179 = vmatpush1.msra.mxu0 %v1137
    %1180 = vmatprep.subr.mxu0 0.0
    %1181 = vmatpush1.msra.mxu0 %v1138
    %1182 = vmatprep.subr.mxu0 0.0
    %1183 = vmatpush1.msra.mxu0 %v1139
    %1184 = vmatprep.subr.mxu0 0.0
    %1185 = vmatpush1.msra.mxu0 %v1140
    %1186 = vmatprep.subr.mxu0 0.0
    %1187 = vmatpush1.msra.mxu0 %v1141
    %1188 = vmatprep.subr.mxu0 0.0
    %1189 = vmatpush1.msra.mxu0 %v1142
    %1190 = vmatprep.subr.mxu0 0.0
    %1191 = vmatpush1.msra.mxu0 %v1143
    %1192 = vmatprep.subr.mxu0 0.0
    %1193 = vmatpush1.msra.mxu0 %v1144
    %1194 = vmatprep.subr.mxu0 0.0
    %1195 = vmatpush1.msra.mxu0 %v1145
    %1196 = vmatprep.subr.mxu0 0.0
    %1197 = vmatpush1.msra.mxu0 %v1146
    %1198 = vmatprep.subr.mxu0 0.0
    %1199 = vmatpush1.msra.mxu0 %v1147
    %1200 = vmatprep.subr.mxu0 0.0
    %1201 = vmatpush1.msra.mxu0 %v1148
    %1202 = vmatprep.subr.mxu0 0.0
    %1203 = vmatpush1.msra.mxu0 %v1149
    %1204 = vmatprep.subr.mxu0 0.0
    %1205 = vmatpush1.msra.mxu0 %v1150
    %1206 = vmatprep.subr.mxu0 0.0
    %1207 = vmatpush1.msra.mxu0 %v1151
    %1208 = vmatprep.subr.mxu0 0.0
    %1209 = vmatpush1.msra.mxu0 %v1152
    %1210 = vmatprep.subr.mxu0 0.0
    %1211 = vmatpush1.msra.mxu0 %v1153
    %1212 = vmatprep.subr.mxu0 0.0
    %1213 = vmatpush1.msra.mxu0 %v1154
    %1214 = vmatprep.subr.mxu0 0.0
    %1215 = vmatpush1.msra.mxu0 %v1155
    %1216 = vmatprep.subr.mxu0 0.0
    %1217 = vmatpush1.msra.mxu0 %v1156
    %1218 = vmatprep.subr.mxu0 0.0
    %1219 = vmatpush1.msra.mxu0 %v1157
    %1220 = vmatprep.subr.mxu0 0.0
    %1221 = vmatpush1.msra.mxu0 %v1158
    %1222 = vmatprep.subr.mxu0 0.0
    %1223 = vmatpush1.msra.mxu0 %v1159
    %1224 = vmatprep.subr.mxu0 0.0
    %1225 = vmatpush1.msra.mxu0 %v1160
    %1226 = vmatprep.subr.mxu0 0.0
    %1227 = vmatpush1.msra.mxu0 %v1161
    %1228 = vmatprep.subr.mxu0 0.0
    %1229 = vmatpush1.msra.mxu0 %v1162
    %1230 = vmatprep.subr.mxu0 0.0
    %1231 = vmatpush1.msra.mxu0 %v1163
    %1232 = vmatprep.subr.mxu0 0.0
    %1233 = vmatpush1.msra.mxu0 %v1164
    %1234 = vmatprep.subr.mxu0 0.0
    %1235 = vmatpush1.msra.mxu0 %v1165
    %1236 = vmatprep.subr.mxu0 0.0
    %1237 = vmatpush1.msra.mxu0 %v1166
    %1238 = vmatprep.mubr.f32.mxu0 %v1132
    %1239 = vmatmul.mubr.f32.gmra.mrb[0].mxu0 %v1131
    %v1240 = vpop.f32.mrb[0].mxu0
    %v1241 = vadd.f32 %v1172, %v1240
    %v1242 = vpop.f32.mrb[0].mxu0
    %1243 = vmatprep.mubr.f32.mxu0 %v1134
    %1244 = vmatmul.mubr.f32.gmra.mrb[0].mxu0 %v1133
    %v1245 = vpop.f32.mrb[0].mxu0
    %v1246 = vadd.f32 %v1172, %v1245
    %v1247 = vpop.f32.mrb[0].mxu0
    %1248 = vdwg.mxu0
    %v1249 = vmax.f32 %v1241, 0.0
    %v1250 = vmax.f32 %v1246, 0.0
    %v1251 = vld [vmem:[%s16] sm:$0xff]
    %v1252 = vld [vmem:[%s16 + $0x8] sm:$0xff]
    %v1253 = vld [vmem:[%s16 + $0x10] sm:$0xff]
    %v1254 = vld [vmem:[%s16 + $0x18] sm:$0xff]
    %v1255 = vld [vmem:[%s16 + $0x20] sm:$0xff]
    %v1256 = vld [vmem:[%s16 + $0x28] sm:$0xff]
    %v1257 = vld [vmem:[%s16 + $0x30] sm:$0xff]
    %v1258 = vld [vmem:[%s16 + $0x38] sm:$0xff]
    %v1259 = vld [vmem:[%s16 + $0x40] sm:$0xff]
    %v1260 = vld [vmem:[%s16 + $0x48] sm:$0xff]
    %v1261 = vld [vmem:[%s16 + $0x50] sm:$0xff]
    %v1262 = vld [vmem:[%s16 + $0x58] sm:$0xff]
    %v1263 = vld [vmem:[%s16 + $0x60] sm:$0xff]
    %v1264 = vld [vmem:[%s16 + $0x68] sm:$0xff]
    %v1265 = vld [vmem:[%s16 + $0x70] sm:$0xff]
    %v1266 = vld [vmem:[%s16 + $0x78] sm:$0xff]
    %v1267 = vld [vmem:[#allocation16] sm:$0x1]
    %v1269 = vlaneseq
    %v1270 = vshrl.u32 %v1269, 7
    %v1271 = vsub.s32 0, %v1270
    %v1272 = vrot.slane %v1267, %v1271
    %1274 = vmatprep.subr.mxu0 0.0
    %1275 = vmatpush1.msra.mxu0 %v1251
    %1276 = vmatprep.subr.mxu0 0.0
    %1277 = vmatpush1.msra.mxu0 %v1252
    %1278 = vmatprep.subr.mxu0 0.0
    %1279 = vmatpush1.msra.mxu0 %v1253
    %1280 = vmatprep.subr.mxu0 0.0
    %1281 = vmatpush1.msra.mxu0 %v1254
    %1282 = vmatprep.subr.mxu0 0.0
    %1283 = vmatpush1.msra.mxu0 %v1255
    %1284 = vmatprep.subr.mxu0 0.0
    %1285 = vmatpush1.msra.mxu0 %v1256
    %1286 = vmatprep.subr.mxu0 0.0
    %1287 = vmatpush1.msra.mxu0 %v1257
    %1288 = vmatprep.subr.mxu0 0.0
    %1289 = vmatpush1.msra.mxu0 %v1258
    %1290 = vmatprep.subr.mxu0 0.0
    %1291 = vmatpush1.msra.mxu0 %v1259
    %1292 = vmatprep.subr.mxu0 0.0
    %1293 = vmatpush1.msra.mxu0 %v1260
    %1294 = vmatprep.subr.mxu0 0.0
    %1295 = vmatpush1.msra.mxu0 %v1261
    %1296 = vmatprep.subr.mxu0 0.0
    %1297 = vmatpush1.msra.mxu0 %v1262
    %1298 = vmatprep.subr.mxu0 0.0
    %1299 = vmatpush1.msra.mxu0 %v1263
    %1300 = vmatprep.subr.mxu0 0.0
    %1301 = vmatpush1.msra.mxu0 %v1264
    %1302 = vmatprep.subr.mxu0 0.0
    %1303 = vmatpush1.msra.mxu0 %v1265
    %1304 = vmatprep.subr.mxu0 0.0
    %1305 = vmatpush1.msra.mxu0 %v1266
    %1306 = vmatprep.subr.mxu0 0.0
    %1307 = vmatpush1.msra.mxu0 0.0
    %1308 = vmatprep.subr.mxu0 0.0
    %1309 = vmatpush1.msra.mxu0 0.0
    %1310 = vmatprep.subr.mxu0 0.0
    %1311 = vmatpush1.msra.mxu0 0.0
    %1312 = vmatprep.subr.mxu0 0.0
    %1313 = vmatpush1.msra.mxu0 0.0
    %1314 = vmatprep.subr.mxu0 0.0
    %1315 = vmatpush1.msra.mxu0 0.0
    %1316 = vmatprep.subr.mxu0 0.0
    %1317 = vmatpush1.msra.mxu0 0.0
    %1318 = vmatprep.subr.mxu0 0.0
    %1319 = vmatpush1.msra.mxu0 0.0
    %1320 = vmatprep.subr.mxu0 0.0
    %1321 = vmatpush1.msra.mxu0 0.0
    %1322 = vmatprep.subr.mxu0 0.0
    %1323 = vmatpush1.msra.mxu0 0.0
    %1324 = vmatprep.subr.mxu0 0.0
    %1325 = vmatpush1.msra.mxu0 0.0
    %1326 = vmatprep.subr.mxu0 0.0
    %1327 = vmatpush1.msra.mxu0 0.0
    %1328 = vmatprep.subr.mxu0 0.0
    %1329 = vmatpush1.msra.mxu0 0.0
    %1330 = vmatprep.subr.mxu0 0.0
    %1331 = vmatpush1.msra.mxu0 0.0
    %1332 = vmatprep.subr.mxu0 0.0
    %1333 = vmatpush1.msra.mxu0 0.0
    %1334 = vmatprep.subr.mxu0 0.0
    %1335 = vmatpush1.msra.mxu0 0.0
    %1336 = vmatprep.subr.mxu0 0.0
    %1337 = vmatpush1.msra.mxu0 0.0
    %1338 = vmatprep.mubr.f32.mxu0 0.0
    %1339 = vmatmul.mubr.f32.gmra.mrb[0].mxu0 %v1249
    %v1340 = vpop.f32.mrb[0].mxu0
    %v1341 = vadd.f32 %v1272, %v1340
    %v1342 = vpop.f32.mrb[0].mxu0
    %1343 = vmatprep.mubr.f32.mxu0 0.0
    %1344 = vmatmul.mubr.f32.gmra.mrb[0].mxu0 %v1250
    %v1345 = vpop.f32.mrb[0].mxu0
    %v1346 = vadd.f32 %v1272, %v1345
    %v1347 = vpop.f32.mrb[0].mxu0
    %1348 = vdwg.mxu0
    %v1349 = vmax.f32 %v1341, 0.0
    %v1350 = vmax.f32 %v1346, 0.0
    %v1351 = vld [vmem:[#allocation17] sm:$0xff]
    %v1352 = vld [vmem:[#allocation17 + $0x8] sm:$0xff]
    %v1353 = vld [vmem:[#allocation17 + $0x10] sm:$0xff]
    %v1354 = vld [vmem:[#allocation17 + $0x18] sm:$0xff]
    %v1355 = vld [vmem:[#allocation17 + $0x20] sm:$0xff]
    %v1356 = vld [vmem:[#allocation17 + $0x28] sm:$0xff]
    %v1357 = vld [vmem:[#allocation17 + $0x30] sm:$0xff]
    %v1358 = vld [vmem:[#allocation17 + $0x38] sm:$0xff]
    %v1359 = vld [vmem:[#allocation19] sm:$0x3]
    %v1361 = vlaneseq
    %v1362 = vshrl.u32 %v1361, 7
    %v1363 = vsub.s32 0, %v1362
    %v1364 = vrot.slane %v1359, %v1363
    %v1365 = vlaneseq
    %v1366 = vshrl.u32 %v1365, 7
    %v1367 = vsub.s32 1, %v1366
    %v1368 = vrot.slane %v1359, %v1367
    %v1372 = vsel %vm334, %v1026, 0
    %v1375 = vsel %vm334, %v1027, 0
    %1377 = vmatprep.subr.mxu0 %v1352
    %1378 = vmatpush1.msra.mxu0 %v1351
    %1379 = vmatprep.subr.mxu0 %v1354
    %1380 = vmatpush1.msra.mxu0 %v1353
    %1381 = vmatprep.subr.mxu0 %v1356
    %1382 = vmatpush1.msra.mxu0 %v1355
    %1383 = vmatprep.subr.mxu0 %v1358
    %1384 = vmatpush1.msra.mxu0 %v1357
    %1385 = vmatprep.subr.mxu0 0.0
    %1386 = vmatpush1.msra.mxu0 0.0
    %1387 = vmatprep.subr.mxu0 0.0
    %1388 = vmatpush1.msra.mxu0 0.0
    %1389 = vmatprep.subr.mxu0 0.0
    %1390 = vmatpush1.msra.mxu0 0.0
    %1391 = vmatprep.subr.mxu0 0.0
    %1392 = vmatpush1.msra.mxu0 0.0
    %1393 = vmatprep.subr.mxu0 0.0
    %1394 = vmatpush1.msra.mxu0 0.0
    %1395 = vmatprep.subr.mxu0 0.0
    %1396 = vmatpush1.msra.mxu0 0.0
    %1397 = vmatprep.subr.mxu0 0.0
    %1398 = vmatpush1.msra.mxu0 0.0
    %1399 = vmatprep.subr.mxu0 0.0
    %1400 = vmatpush1.msra.mxu0 0.0
    %1401 = vmatprep.subr.mxu0 0.0
    %1402 = vmatpush1.msra.mxu0 0.0
    %1403 = vmatprep.subr.mxu0 0.0
    %1404 = vmatpush1.msra.mxu0 0.0
    %1405 = vmatprep.subr.mxu0 0.0
    %1406 = vmatpush1.msra.mxu0 0.0
    %1407 = vmatprep.subr.mxu0 0.0
    %1408 = vmatpush1.msra.mxu0 0.0
    %1409 = vmatprep.subr.mxu0 0.0
    %1410 = vmatpush1.msra.mxu0 0.0
    %1411 = vmatprep.subr.mxu0 0.0
    %1412 = vmatpush1.msra.mxu0 0.0
    %1413 = vmatprep.subr.mxu0 0.0
    %1414 = vmatpush1.msra.mxu0 0.0
    %1415 = vmatprep.subr.mxu0 0.0
    %1416 = vmatpush1.msra.mxu0 0.0
    %1417 = vmatprep.subr.mxu0 0.0
    %1418 = vmatpush1.msra.mxu0 0.0
    %1419 = vmatprep.subr.mxu0 0.0
    %1420 = vmatpush1.msra.mxu0 0.0
    %1421 = vmatprep.subr.mxu0 0.0
    %1422 = vmatpush1.msra.mxu0 0.0
    %1423 = vmatprep.subr.mxu0 0.0
    %1424 = vmatpush1.msra.mxu0 0.0
    %1425 = vmatprep.subr.mxu0 0.0
    %1426 = vmatpush1.msra.mxu0 0.0
    %1427 = vmatprep.subr.mxu0 0.0
    %1428 = vmatpush1.msra.mxu0 0.0
    %1429 = vmatprep.subr.mxu0 0.0
    %1430 = vmatpush1.msra.mxu0 0.0
    %1431 = vmatprep.subr.mxu0 0.0
    %1432 = vmatpush1.msra.mxu0 0.0
    %1433 = vmatprep.subr.mxu0 0.0
    %1434 = vmatpush1.msra.mxu0 0.0
    %1435 = vmatprep.subr.mxu0 0.0
    %1436 = vmatpush1.msra.mxu0 0.0
    %1437 = vmatprep.subr.mxu0 0.0
    %1438 = vmatpush1.msra.mxu0 0.0
    %1439 = vmatprep.subr.mxu0 0.0
    %1440 = vmatpush1.msra.mxu0 0.0
    %1441 = vmatprep.mubr.f32.mxu0 0.0
    %1442 = vmatmul.mubr.f32.gmra.mrb[0].mxu0 %v1372
    %v1443 = vpop.f32.mrb[0].mxu0
    %v1444 = vadd.f32 %v1364, %v1443
    %v1445 = vpop.f32.mrb[0].mxu0
    %v1446 = vadd.f32 %v1368, %v1445
    %1447 = vmatprep.mubr.f32.mxu0 0.0
    %1448 = vmatmul.mubr.f32.gmra.mrb[0].mxu0 %v1375
    %v1449 = vpop.f32.mrb[0].mxu0
    %v1450 = vadd.f32 %v1364, %v1449
    %v1451 = vpop.f32.mrb[0].mxu0
    %v1452 = vadd.f32 %v1368, %v1451
    %1453 = vdwg.mxu0
    %v1454 = vmax.f32 %v1444, 0.0
    %v1455 = vmax.f32 %v1446, 0.0
    %v1456 = vmax.f32 %v1450, 0.0
    %v1457 = vmax.f32 %v1452, 0.0
    %v1458 = vld [vmem:[#allocation20] sm:$0xff]
    %v1459 = vld [vmem:[#allocation20 + $0x8] sm:$0xff]
    %v1460 = vld [vmem:[#allocation20 + $0x10] sm:$0xff]
    %v1461 = vld [vmem:[#allocation20 + $0x18] sm:$0xff]
    %v1462 = vld [vmem:[#allocation20 + $0x20] sm:$0xff]
    %v1463 = vld [vmem:[#allocation20 + $0x28] sm:$0xff]
    %v1464 = vld [vmem:[#allocation20 + $0x30] sm:$0xff]
    %v1465 = vld [vmem:[#allocation20 + $0x38] sm:$0xff]
    %v1466 = vld [vmem:[#allocation20 + $0x40] sm:$0xff]
    %v1467 = vld [vmem:[#allocation20 + $0x48] sm:$0xff]
    %v1468 = vld [vmem:[#allocation20 + $0x50] sm:$0xff]
    %v1469 = vld [vmem:[#allocation20 + $0x58] sm:$0xff]
    %v1470 = vld [vmem:[#allocation20 + $0x60] sm:$0xff]
    %v1471 = vld [vmem:[#allocation20 + $0x68] sm:$0xff]
    %v1472 = vld [vmem:[#allocation20 + $0x70] sm:$0xff]
    %v1473 = vld [vmem:[#allocation20 + $0x78] sm:$0xff]
    %v1474 = vld [vmem:[#allocation20 + $0x80] sm:$0xff]
    %v1475 = vld [vmem:[#allocation20 + $0x88] sm:$0xff]
    %v1476 = vld [vmem:[#allocation20 + $0x90] sm:$0xff]
    %v1477 = vld [vmem:[#allocation20 + $0x98] sm:$0xff]
    %v1478 = vld [vmem:[#allocation20 + $0xa0] sm:$0xff]
    %v1479 = vld [vmem:[#allocation20 + $0xa8] sm:$0xff]
    %v1480 = vld [vmem:[#allocation20 + $0xb0] sm:$0xff]
    %v1481 = vld [vmem:[#allocation20 + $0xb8] sm:$0xff]
    %v1482 = vld [vmem:[#allocation20 + $0xc0] sm:$0xff]
    %v1483 = vld [vmem:[#allocation20 + $0xc8] sm:$0xff]
    %v1484 = vld [vmem:[#allocation20 + $0xd0] sm:$0xff]
    %v1485 = vld [vmem:[#allocation20 + $0xd8] sm:$0xff]
    %v1486 = vld [vmem:[#allocation20 + $0xe0] sm:$0xff]
    %v1487 = vld [vmem:[#allocation20 + $0xe8] sm:$0xff]
    %v1488 = vld [vmem:[#allocation20 + $0xf0] sm:$0xff]
    %v1489 = vld [vmem:[#allocation20 + $0xf8] sm:$0xff]
    %v1490 = vld [vmem:[#allocation22] sm:$0x1]
    %v1492 = vlaneseq
    %v1493 = vshrl.u32 %v1492, 7
    %v1494 = vsub.s32 0, %v1493
    %v1495 = vrot.slane %v1490, %v1494
    %1497 = vmatprep.subr.mxu0 0.0
    %1498 = vmatpush1.msra.mxu0 %v1458
    %1499 = vmatprep.subr.mxu0 0.0
    %1500 = vmatpush1.msra.mxu0 %v1459
    %1501 = vmatprep.subr.mxu0 0.0
    %1502 = vmatpush1.msra.mxu0 %v1460
    %1503 = vmatprep.subr.mxu0 0.0
    %1504 = vmatpush1.msra.mxu0 %v1461
    %1505 = vmatprep.subr.mxu0 0.0
    %1506 = vmatpush1.msra.mxu0 %v1462
    %1507 = vmatprep.subr.mxu0 0.0
    %1508 = vmatpush1.msra.mxu0 %v1463
    %1509 = vmatprep.subr.mxu0 0.0
    %1510 = vmatpush1.msra.mxu0 %v1464
    %1511 = vmatprep.subr.mxu0 0.0
    %1512 = vmatpush1.msra.mxu0 %v1465
    %1513 = vmatprep.subr.mxu0 0.0
    %1514 = vmatpush1.msra.mxu0 %v1466
    %1515 = vmatprep.subr.mxu0 0.0
    %1516 = vmatpush1.msra.mxu0 %v1467
    %1517 = vmatprep.subr.mxu0 0.0
    %1518 = vmatpush1.msra.mxu0 %v1468
    %1519 = vmatprep.subr.mxu0 0.0
    %1520 = vmatpush1.msra.mxu0 %v1469
    %1521 = vmatprep.subr.mxu0 0.0
    %1522 = vmatpush1.msra.mxu0 %v1470
    %1523 = vmatprep.subr.mxu0 0.0
    %1524 = vmatpush1.msra.mxu0 %v1471
    %1525 = vmatprep.subr.mxu0 0.0
    %1526 = vmatpush1.msra.mxu0 %v1472
    %1527 = vmatprep.subr.mxu0 0.0
    %1528 = vmatpush1.msra.mxu0 %v1473
    %1529 = vmatprep.subr.mxu0 0.0
    %1530 = vmatpush1.msra.mxu0 %v1474
    %1531 = vmatprep.subr.mxu0 0.0
    %1532 = vmatpush1.msra.mxu0 %v1475
    %1533 = vmatprep.subr.mxu0 0.0
    %1534 = vmatpush1.msra.mxu0 %v1476
    %1535 = vmatprep.subr.mxu0 0.0
    %1536 = vmatpush1.msra.mxu0 %v1477
    %1537 = vmatprep.subr.mxu0 0.0
    %1538 = vmatpush1.msra.mxu0 %v1478
    %1539 = vmatprep.subr.mxu0 0.0
    %1540 = vmatpush1.msra.mxu0 %v1479
    %1541 = vmatprep.subr.mxu0 0.0
    %1542 = vmatpush1.msra.mxu0 %v1480
    %1543 = vmatprep.subr.mxu0 0.0
    %1544 = vmatpush1.msra.mxu0 %v1481
    %1545 = vmatprep.subr.mxu0 0.0
    %1546 = vmatpush1.msra.mxu0 %v1482
    %1547 = vmatprep.subr.mxu0 0.0
    %1548 = vmatpush1.msra.mxu0 %v1483
    %1549 = vmatprep.subr.mxu0 0.0
    %1550 = vmatpush1.msra.mxu0 %v1484
    %1551 = vmatprep.subr.mxu0 0.0
    %1552 = vmatpush1.msra.mxu0 %v1485
    %1553 = vmatprep.subr.mxu0 0.0
    %1554 = vmatpush1.msra.mxu0 %v1486
    %1555 = vmatprep.subr.mxu0 0.0
    %1556 = vmatpush1.msra.mxu0 %v1487
    %1557 = vmatprep.subr.mxu0 0.0
    %1558 = vmatpush1.msra.mxu0 %v1488
    %1559 = vmatprep.subr.mxu0 0.0
    %1560 = vmatpush1.msra.mxu0 %v1489
    %1561 = vmatprep.mubr.f32.mxu0 %v1455
    %1562 = vmatmul.mubr.f32.gmra.mrb[0].mxu0 %v1454
    %v1563 = vpop.f32.mrb[0].mxu0
    %v1564 = vadd.f32 %v1495, %v1563
    %v1565 = vpop.f32.mrb[0].mxu0
    %1566 = vmatprep.mubr.f32.mxu0 %v1457
    %1567 = vmatmul.mubr.f32.gmra.mrb[0].mxu0 %v1456
    %v1568 = vpop.f32.mrb[0].mxu0
    %v1569 = vadd.f32 %v1495, %v1568
    %v1570 = vpop.f32.mrb[0].mxu0
    %1571 = vdwg.mxu0
    %v1572 = vmax.f32 %v1564, 0.0
    %v1573 = vmax.f32 %v1569, 0.0
    %v1574 = vld [vmem:[%s22] sm:$0xff]
    %v1575 = vld [vmem:[%s22 + $0x8] sm:$0xff]
    %v1576 = vld [vmem:[%s22 + $0x10] sm:$0xff]
    %v1577 = vld [vmem:[%s22 + $0x18] sm:$0xff]
    %v1578 = vld [vmem:[%s22 + $0x20] sm:$0xff]
    %v1579 = vld [vmem:[%s22 + $0x28] sm:$0xff]
    %v1580 = vld [vmem:[%s22 + $0x30] sm:$0xff]
    %v1581 = vld [vmem:[%s22 + $0x38] sm:$0xff]
    %v1582 = vld [vmem:[%s22 + $0x40] sm:$0xff]
    %v1583 = vld [vmem:[%s22 + $0x48] sm:$0xff]
    %v1584 = vld [vmem:[%s22 + $0x50] sm:$0xff]
    %v1585 = vld [vmem:[%s22 + $0x58] sm:$0xff]
    %v1586 = vld [vmem:[%s22 + $0x60] sm:$0xff]
    %v1587 = vld [vmem:[%s22 + $0x68] sm:$0xff]
    %v1588 = vld [vmem:[%s22 + $0x70] sm:$0xff]
    %v1589 = vld [vmem:[%s22 + $0x78] sm:$0xff]
    %v1590 = vld [vmem:[#allocation23] sm:$0x1]
    %v1592 = vlaneseq
    %v1593 = vshrl.u32 %v1592, 7
    %v1594 = vsub.s32 0, %v1593
    %v1595 = vrot.slane %v1590, %v1594
    %1597 = vmatprep.subr.mxu0 0.0
    %1598 = vmatpush1.msra.mxu0 %v1574
    %1599 = vmatprep.subr.mxu0 0.0
    %1600 = vmatpush1.msra.mxu0 %v1575
    %1601 = vmatprep.subr.mxu0 0.0
    %1602 = vmatpush1.msra.mxu0 %v1576
    %1603 = vmatprep.subr.mxu0 0.0
    %1604 = vmatpush1.msra.mxu0 %v1577
    %1605 = vmatprep.subr.mxu0 0.0
    %1606 = vmatpush1.msra.mxu0 %v1578
    %1607 = vmatprep.subr.mxu0 0.0
    %1608 = vmatpush1.msra.mxu0 %v1579
    %1609 = vmatprep.subr.mxu0 0.0
    %1610 = vmatpush1.msra.mxu0 %v1580
    %1611 = vmatprep.subr.mxu0 0.0
    %1612 = vmatpush1.msra.mxu0 %v1581
    %1613 = vmatprep.subr.mxu0 0.0
    %1614 = vmatpush1.msra.mxu0 %v1582
    %1615 = vmatprep.subr.mxu0 0.0
    %1616 = vmatpush1.msra.mxu0 %v1583
    %1617 = vmatprep.subr.mxu0 0.0
    %1618 = vmatpush1.msra.mxu0 %v1584
    %1619 = vmatprep.subr.mxu0 0.0
    %1620 = vmatpush1.msra.mxu0 %v1585
    %1621 = vmatprep.subr.mxu0 0.0
    %1622 = vmatpush1.msra.mxu0 %v1586
    %1623 = vmatprep.subr.mxu0 0.0
    %1624 = vmatpush1.msra.mxu0 %v1587
    %1625 = vmatprep.subr.mxu0 0.0
    %1626 = vmatpush1.msra.mxu0 %v1588
    %1627 = vmatprep.subr.mxu0 0.0
    %1628 = vmatpush1.msra.mxu0 %v1589
    %1629 = vmatprep.subr.mxu0 0.0
    %1630 = vmatpush1.msra.mxu0 0.0
    %1631 = vmatprep.subr.mxu0 0.0
    %1632 = vmatpush1.msra.mxu0 0.0
    %1633 = vmatprep.subr.mxu0 0.0
    %1634 = vmatpush1.msra.mxu0 0.0
    %1635 = vmatprep.subr.mxu0 0.0
    %1636 = vmatpush1.msra.mxu0 0.0
    %1637 = vmatprep.subr.mxu0 0.0
    %1638 = vmatpush1.msra.mxu0 0.0
    %1639 = vmatprep.subr.mxu0 0.0
    %1640 = vmatpush1.msra.mxu0 0.0
    %1641 = vmatprep.subr.mxu0 0.0
    %1642 = vmatpush1.msra.mxu0 0.0
    %1643 = vmatprep.subr.mxu0 0.0
    %1644 = vmatpush1.msra.mxu0 0.0
    %1645 = vmatprep.subr.mxu0 0.0
    %1646 = vmatpush1.msra.mxu0 0.0
    %1647 = vmatprep.subr.mxu0 0.0
    %1648 = vmatpush1.msra.mxu0 0.0
    %1649 = vmatprep.subr.mxu0 0.0
    %1650 = vmatpush1.msra.mxu0 0.0
    %1651 = vmatprep.subr.mxu0 0.0
    %1652 = vmatpush1.msra.mxu0 0.0
    %1653 = vmatprep.subr.mxu0 0.0
    %1654 = vmatpush1.msra.mxu0 0.0
    %1655 = vmatprep.subr.mxu0 0.0
    %1656 = vmatpush1.msra.mxu0 0.0
    %1657 = vmatprep.subr.mxu0 0.0
    %1658 = vmatpush1.msra.mxu0 0.0
    %1659 = vmatprep.subr.mxu0 0.0
    %1660 = vmatpush1.msra.mxu0 0.0
    %1661 = vmatprep.mubr.f32.mxu0 0.0
    %1662 = vmatmul.mubr.f32.gmra.mrb[0].mxu0 %v1572
    %v1663 = vpop.f32.mrb[0].mxu0
    %v1664 = vadd.f32 %v1595, %v1663
    %v1665 = vpop.f32.mrb[0].mxu0
    %1666 = vmatprep.mubr.f32.mxu0 0.0
    %1667 = vmatmul.mubr.f32.gmra.mrb[0].mxu0 %v1573
    %v1668 = vpop.f32.mrb[0].mxu0
    %v1669 = vadd.f32 %v1595, %v1668
    %v1670 = vpop.f32.mrb[0].mxu0
    %1671 = vdwg.mxu0
    %v1672 = vmax.f32 %v1664, 0.0
    %v1673 = vmax.f32 %v1669, 0.0
    %vm1674 = vcmask 523264
    %v1676 = vsel %vm1674, %v1349, 0
    %v1679 = vsel %vm1674, %v1350, 0
    %v1682 = vsel %vm1674, %v1672, 0
    %v1685 = vsel %vm1674, %v1673, 0
    %1687 = vmatprep.subr.mxu0 0.0
    %1688 = vmatpush1.xpose.msra.mxu0 %v1682
    %1689 = vmatprep.subr.mxu0 0.0
    %1690 = vmatpush1.xpose.msra.mxu0 %v1685
    %1691 = vmatprep.subr.mxu0 0.0
    %1692 = vmatpush1.xpose.msra.mxu0 0.0
    %1693 = vmatprep.subr.mxu0 0.0
    %1694 = vmatpush1.xpose.msra.mxu0 0.0
    %1695 = vmatprep.subr.mxu0 0.0
    %1696 = vmatpush1.xpose.msra.mxu0 0.0
    %1697 = vmatprep.subr.mxu0 0.0
    %1698 = vmatpush1.xpose.msra.mxu0 0.0
    %1699 = vmatprep.subr.mxu0 0.0
    %1700 = vmatpush1.xpose.msra.mxu0 0.0
    %1701 = vmatprep.subr.mxu0 0.0
    %1702 = vmatpush1.xpose.msra.mxu0 0.0
    %1703 = vmatprep.subr.mxu0 0.0
    %1704 = vmatpush1.xpose.msra.mxu0 0.0
    %1705 = vmatprep.subr.mxu0 0.0
    %1706 = vmatpush1.xpose.msra.mxu0 0.0
    %1707 = vmatprep.subr.mxu0 0.0
    %1708 = vmatpush1.xpose.msra.mxu0 0.0
    %1709 = vmatprep.subr.mxu0 0.0
    %1710 = vmatpush1.xpose.msra.mxu0 0.0
    %1711 = vmatprep.subr.mxu0 0.0
    %1712 = vmatpush1.xpose.msra.mxu0 0.0
    %1713 = vmatprep.subr.mxu0 0.0
    %1714 = vmatpush1.xpose.msra.mxu0 0.0
    %1715 = vmatprep.subr.mxu0 0.0
    %1716 = vmatpush1.xpose.msra.mxu0 0.0
    %1717 = vmatprep.subr.mxu0 0.0
    %1718 = vmatpush1.xpose.msra.mxu0 0.0
    %1719 = vmatprep.subr.mxu0 0.0
    %1720 = vmatpush1.xpose.msra.mxu0 0.0
    %1721 = vmatprep.subr.mxu0 0.0
    %1722 = vmatpush1.xpose.msra.mxu0 0.0
    %1723 = vmatprep.subr.mxu0 0.0
    %1724 = vmatpush1.xpose.msra.mxu0 0.0
    %1725 = vmatprep.subr.mxu0 0.0
    %1726 = vmatpush1.xpose.msra.mxu0 0.0
    %1727 = vmatprep.subr.mxu0 0.0
    %1728 = vmatpush1.xpose.msra.mxu0 0.0
    %1729 = vmatprep.subr.mxu0 0.0
    %1730 = vmatpush1.xpose.msra.mxu0 0.0
    %1731 = vmatprep.subr.mxu0 0.0
    %1732 = vmatpush1.xpose.msra.mxu0 0.0
    %1733 = vmatprep.subr.mxu0 0.0
    %1734 = vmatpush1.xpose.msra.mxu0 0.0
    %1735 = vmatprep.subr.mxu0 0.0
    %1736 = vmatpush1.xpose.msra.mxu0 0.0
    %1737 = vmatprep.subr.mxu0 0.0
    %1738 = vmatpush1.xpose.msra.mxu0 0.0
    %1739 = vmatprep.subr.mxu0 0.0
    %1740 = vmatpush1.xpose.msra.mxu0 0.0
    %1741 = vmatprep.subr.mxu0 0.0
    %1742 = vmatpush1.xpose.msra.mxu0 0.0
    %1743 = vmatprep.subr.mxu0 0.0
    %1744 = vmatpush1.xpose.msra.mxu0 0.0
    %1745 = vmatprep.subr.mxu0 0.0
    %1746 = vmatpush1.xpose.msra.mxu0 0.0
    %1747 = vmatprep.subr.mxu0 0.0
    %1748 = vmatpush1.xpose.msra.mxu0 0.0
    %1749 = vmatprep.subr.mxu0 0.0
    %1750 = vmatpush1.xpose.msra.mxu0 0.0
    %1751 = vmatprep.mubr.f32.mxu0 0.0
    %1752 = vmatmul.mubr.f32.gmra.mrb[0].mxu0 %v1676
    %v1753 = vpop.f32.mrb[0].mxu0
    %v1754 = vadd.f32 0.0, %v1753
    %v1755 = vpop.f32.mrb[0].mxu0
    %1756 = vmatprep.mubr.f32.mxu0 0.0
    %1757 = vmatmul.mubr.f32.gmra.mrb[0].mxu0 %v1679
    %v1758 = vpop.f32.mrb[0].mxu0
    %v1759 = vadd.f32 0.0, %v1758
    %v1760 = vpop.f32.mrb[0].mxu0
    %1761 = vdwg.mxu0
    %1762 = vst.msk [vmem:[#allocation25] sm:$0xff] %vm300, %v1754
    %1763 = vst.msk [vmem:[#allocation25 + $0x8] sm:$0xff] %vm300, %v1759
    %1764 = vst.msk [vmem:[#allocation26] sm:$0xff] %vm1674, %v1349
    %1765 = vst.msk [vmem:[#allocation26 + $0x8] sm:$0xff] %vm1674, %v1350
    %1766 = vst.msk [vmem:[#allocation28] sm:$0xff] %vm1674, %v1672
    %vm1767 = vcmask 519168
    %1768 = vst.msk [vmem:[#allocation28 + $0x8] sm:$0xf] %vm1767, %v1673
    // Predicated region
    $region154: #{model_forward.1} parent=1 // pred_check
      _
    $region155: #{model_forward.1} parent=1 // pred_check_branch
      %1770 = sbr.rel (0) target = $region157
    $region156: #{model_forward.1} parent=1 // pred_region
      %s1772 = ssub.s32 256, 256
      %1773 = vsyncadd [#allocation4], %s1772
      %s1774 = sshll.u32 [#allocation25], 4
      %s1775 = int_to_ptr.vmem [resolvable:$true] %s1774
      %1780 = dma.vmem_to_hbm [thread:$0]  %s1775, 256, %s24, [#allocation4], 128, 128, 8
    $region157: #{model_forward.1} parent=1 // pred_fallthru
      _
    // Predicated region
    $region158: #{model_forward.1} parent=1 // pred_check
      _
    $region159: #{model_forward.1} parent=1 // pred_check_branch
      %1782 = sbr.rel (0) target = $region161
    $region160: #{model_forward.1} parent=1 // pred_region
      %s1784 = ssub.s32 256, 256
      %1785 = vsyncadd [#allocation27], %s1784
      %s1786 = sshll.u32 [#allocation26], 4
      %s1787 = int_to_ptr.vmem [resolvable:$true] %s1786
      %1792 = dma.vmem_to_hbm [thread:$0]  %s1787, 256, %s25, [#allocation27], 128, 128, 8
    $region161: #{model_forward.1} parent=1 // pred_fallthru
      _
    // Predicated region
    $region162: #{model_forward.1} parent=1 // pred_check
      _
    $region163: #{model_forward.1} parent=1 // pred_check_branch
      %1794 = sbr.rel (0) target = $region165
    $region164: #{model_forward.1} parent=1 // pred_region
      %s1796 = ssub.s32 256, 256
      %1797 = vsyncadd [#allocation27], %s1796
      %s1798 = sshll.u32 [#allocation28], 4
      %s1799 = int_to_ptr.vmem [resolvable:$true] %s1798
      %1804 = dma.vmem_to_hbm [thread:$0]  %s1799, 256, %s26, [#allocation27], 128, 128, 8
    $region165: #{model_forward.1} parent=1 // pred_fallthru
      _
    // Predicated region
    $region166: #{model_forward.1} parent=1 // pred_check
      _
    $region167: #{model_forward.1} parent=1 // pred_check_branch
      %1806 = sbr.rel (0) target = $region169
    $region168: #{model_forward.1} parent=1 // pred_region
      %1807 = dma.done [#allocation4], 256
    $region169: #{model_forward.1} parent=1 // pred_fallthru
      _
    // Predicated region
    $region170: #{model_forward.1} parent=1 // pred_check
      _
    $region171: #{model_forward.1} parent=1 // pred_check_branch
      %1809 = sbr.rel (0) target = $region173
    $region172: #{model_forward.1} parent=1 // pred_region
      %1810 = dma.done [#allocation27], 256
    $region173: #{model_forward.1} parent=1 // pred_fallthru
      _
    // Predicated region
    $region174: #{model_forward.1} parent=1 // pred_check
      _
    $region175: #{model_forward.1} parent=1 // pred_check_branch
      %1812 = sbr.rel (0) target = $region177
    $region176: #{model_forward.1} parent=1 // pred_region
      %1813 = dma.done [#allocation27], 256
    $region177: #{model_forward.1} parent=1 // pred_fallthru
      _
    %1814 = vsyncpa [#allocation3], 1
    %1815 = vsyncpa [#allocation6], 1
    %1816 = vsyncpa [#allocation9], 1
    %1817 = vsyncpa [#allocation12], 1
    %1818 = vsyncpa [#allocation15], 1
    %1819 = vsyncpa [#allocation18], 1
    %1820 = vsyncpa [#allocation21], 1
    %1821 = vsyncpa [#allocation24], 1
    %1822 = vsyncpa [#allocation4], 1
    %1823 = vsyncpa [#allocation27], 1

</llo_original>
